<compile_context>
chip_gen: v5e
topology: v5e:2x2
jax: 0.10.0
libtpu: 0.0.40
codegen_flags: <defaults>
</compile_context>

<pallas_src>
import functools

import jax
import jax.numpy as jnp
import numpy as np
from jax.experimental import pallas as pl
from jax.experimental.pallas import tpu as pltpu


def _phase_encoder_kernel(x_ref, wr_ref, wi_ref, br_ref, bi_ref, out_ref,
                          *, n_sig, c2, t_len, alpha):
    """x_ref: (n_sig, 1, 2, f_tile, T) VMEM (component 0=real, 1=imag).
    wr/wi_ref: flat (c2*n_sig*3,) folded complex taps in SMEM.
    br/bi_ref: (c2,) folded complex bias in SMEM.
    out_ref: (1, c2, f_tile, T) VMEM."""
    f_tile = x_ref.shape[3]

    # Lane index along T: masks for the causal (left-pad-2) shifted taps.
    t_idx = jax.lax.broadcasted_iota(jnp.int32, (f_tile, t_len), 1)
    valid_by_shift = {1: t_idx >= 1, 2: t_idx >= 2}

    # Build the 3 causal taps of every signal's real/imag plane once; they are
    # reused by all c2 output channels.  Tap k at time t reads x[t - (2 - k)]
    # with zeros where t - (2 - k) < 0 (== ConstantPad2d((2,0)) + conv tap).
    xr_taps, xi_taps = [], []
    for s in range(n_sig):
        xr = x_ref[s, 0, 0, :, :]
        xi = x_ref[s, 0, 1, :, :]
        r_taps, i_taps = [], []
        for k in range(3):
            shift = 2 - k
            if shift == 0:
                r_taps.append(xr)
                i_taps.append(xi)
            else:
                valid = valid_by_shift[shift]
                r_taps.append(jnp.where(valid, pltpu.roll(xr, shift, axis=1), 0.0))
                i_taps.append(jnp.where(valid, pltpu.roll(xi, shift, axis=1), 0.0))
        xr_taps.append(r_taps)
        xi_taps.append(i_taps)

    # Fused complex affine map per output channel (stage-1 conv + stage-2 1x1
    # were folded into W_eff / b_eff in the wrapper), then magnitude ** alpha.
    for o in range(c2):
        rn = None
        im = None
        for s in range(n_sig):
            for k in range(3):
                idx = (o * n_sig + s) * 3 + k
                wr = wr_ref[idx]
                wi = wi_ref[idx]
                xr = xr_taps[s][k]
                xi = xi_taps[s][k]
                r_t = wr * xr - wi * xi
                i_t = wi * xr + wr * xi
                rn = r_t if rn is None else rn + r_t
                im = i_t if im is None else im + i_t
        rn = rn + br_ref[o]
        im = im + bi_ref[o]
        amp2 = rn * rn + im * im + 1e-8
        if alpha == 0.5:
            out_ref[0, o, :, :] = jnp.sqrt(jnp.sqrt(amp2))      # amp ** 0.5
        else:
            out_ref[0, o, :, :] = jnp.exp((0.5 * alpha) * jnp.log(amp2))


def _pick_f_tile(f_len, t_len, n_sig, c2, budget_bytes=24 * 1024 * 1024):
    """F tile sized so double-buffered blocks + live (f_tile,T) temporaries fit
    a conservative VMEM budget (safe on v5e/v6e/v7x)."""
    est_planes = 10 * n_sig + 2 * c2 + 6   # 2x-buffered in/out + taps + temps
    per_row = est_planes * t_len * 4
    f_tile = min(f_len, max(8, budget_bytes // per_row), 512)
    if f_tile < f_len:
        f_tile = max(8, (f_tile // 8) * 8)  # sublane multiple of 8
    return int(f_tile)


def phase_encoder(cspecs, w1r, w1i, b1r, b1i, w2r, w2i, b2r, b2i, alpha=0.5,
                  f_tile=None):
    """cspecs: (n_sig, B, 2, F, T) float32.  Returns (B, n_sig*cout//2, F, T)."""
    n_sig, batch, cin, f_len, t_len = cspecs.shape
    assert cin == 2
    cp = w1r.shape[1]          # cout // 2 per signal
    c2 = n_sig * cp            # output channels

    # ---- fold stage-2 complex 1x1 into the stage-1 complex (1,3) taps ------
    # (plain f32 multiply+sum; avoids any reduced-precision dot on TPU)
    w1r_ = w1r.reshape(n_sig, cp, 3).astype(jnp.float32)
    w1i_ = w1i.reshape(n_sig, cp, 3).astype(jnp.float32)
    w2r_ = w2r.reshape(c2, n_sig, cp).astype(jnp.float32)
    w2i_ = w2i.reshape(c2, n_sig, cp).astype(jnp.float32)
    wr_eff = (w2r_[:, :, :, None] * w1r_[None] - w2i_[:, :, :, None] * w1i_[None]).sum(axis=2)
    wi_eff = (w2i_[:, :, :, None] * w1r_[None] + w2r_[:, :, :, None] * w1i_[None]).sum(axis=2)
    b1_re = (b1r - b1i).astype(jnp.float32)   # real bias of stage-1 complex output
    b1_im = (b1r + b1i).astype(jnp.float32)   # imag bias of stage-1 complex output
    br_eff = (w2r_ * b1_re[None] - w2i_ * b1_im[None]).sum(axis=(1, 2)) + (b2r - b2i)
    bi_eff = (w2i_ * b1_re[None] + w2r_ * b1_im[None]).sum(axis=(1, 2)) + (b2r + b2i)

    if f_tile is None:
        f_tile = _pick_f_tile(f_len, t_len, n_sig, c2)
    n_f = pl.cdiv(f_len, f_tile)

    est_planes = 10 * n_sig + 2 * c2 + 6
    plane_bytes = 4 * f_tile * t_len
    vmem_limit = int(min(48 * 1024 * 1024,
                         max(16 * 1024 * 1024, 2 * est_planes * plane_bytes)))

    smem = pl.BlockSpec(memory_space=pltpu.MemorySpace.SMEM)
    kernel = functools.partial(_phase_encoder_kernel, n_sig=n_sig, c2=c2,
                               t_len=t_len, alpha=float(alpha))
    return pl.pallas_call(
        kernel,
        out_shape=jax.ShapeDtypeStruct((batch, c2, f_len, t_len), jnp.float32),
        grid=(batch, n_f),
        in_specs=[pl.BlockSpec((n_sig, 1, cin, f_tile, t_len),
                               lambda b, f: (0, b, 0, f, 0))] + [smem] * 4,
        out_specs=pl.BlockSpec((1, c2, f_tile, t_len), lambda b, f: (b, 0, f, 0)),
        compiler_params=pltpu.CompilerParams(
            dimension_semantics=("parallel", "parallel"),
            vmem_limit_bytes=vmem_limit),
    )(cspecs.astype(jnp.float32),
      wr_eff.reshape(-1), wi_eff.reshape(-1),
      br_eff.astype(jnp.float32), bi_eff.astype(jnp.float32))


# ----------------------- pure-JAX reference (for checking) -----------------------
def _conv_nchw(x, w, b):
    out = jax.lax.conv_general_dilated(
        x, w, window_strides=(1, 1), padding=((0, 0), (0, 0)),
        dimension_numbers=("NCHW", "OIHW", "NCHW"))
    return out + b[None, :, None, None]


def phase_encoder_ref(cspecs, w1r, w1i, b1r, b1i, w2r, w2i, b2r, b2i, alpha=0.5):
    n_sig = cspecs.shape[0]
    cp = w1r.shape[1]
    outs = []
    for s in range(n_sig):
        x = jnp.pad(cspecs[s], ((0, 0), (0, 0), (0, 0), (2, 0)))
        real, imag = x[:, 0:1], x[:, 1:2]
        r2r = _conv_nchw(real, w1r[s], b1r[s])
        i2i = _conv_nchw(imag, w1i[s], b1i[s])
        r2i = _conv_nchw(real, w1i[s], b1i[s])
        i2r = _conv_nchw(imag, w1r[s], b1r[s])
        outs.append(jnp.concatenate([r2r - i2i, r2i + i2r], axis=1))
    reals = jnp.concatenate([o[:, :cp] for o in outs], axis=1)
    imags = jnp.concatenate([o[:, cp:] for o in outs], axis=1)
    r2r = _conv_nchw(reals, w2r, b2r)
    i2i = _conv_nchw(imags, w2i, b2i)
    r2i = _conv_nchw(reals, w2i, b2i)
    i2r = _conv_nchw(imags, w2r, b2r)
    rn, im = r2r - i2i, r2i + i2r
    amp = jnp.sqrt(rn ** 2 + im ** 2 + 1e-8)
    return amp ** alpha


if __name__ == "__main__":
    # small shapes: PhaseEncoder(cout=4, n_sig=2, cin=2, alpha=0.5)
    B, F_, T_ = 2, 16, 128
    cout, n_sig = 4, 2
    cp = cout // 2
    c2 = n_sig * cp

    key = jax.random.PRNGKey(0)
    kx, k1, k2, k3, k4, k5, k6, k7, k8 = jax.random.split(key, 9)
    cspecs = jax.random.normal(kx, (n_sig, B, 2, F_, T_), jnp.float32)

    # stage-1 complex conv weights: Conv2d(1, cout//2, (1,3)) per signal, std=0.05
    w1r = 0.05 * jax.random.normal(k1, (n_sig, cp, 1, 1, 3), jnp.float32)
    w1i = 0.05 * jax.random.normal(k2, (n_sig, cp, 1, 1, 3), jnp.float32)
    b1r = 0.01 * jax.random.normal(k5, (n_sig, cp), jnp.float32)
    b1i = 0.01 * jax.random.normal(k6, (n_sig, cp), jnp.float32)
    # stage-2 complex 1x1 projection: Conv2d(c2, c2, (1,1)), std=0.05
    w2r = 0.05 * jax.random.normal(k3, (c2, c2, 1, 1), jnp.float32)
    w2i = 0.05 * jax.random.normal(k4, (c2, c2, 1, 1), jnp.float32)
    b2r = 0.01 * jax.random.normal(k7, (c2,), jnp.float32)
    b2i = 0.01 * jax.random.normal(k8, (c2,), jnp.float32)

    out = phase_encoder(cspecs, w1r, w1i, b1r, b1i, w2r, w2i, b2r, b2i, alpha=0.5)
    out = jax.block_until_ready(out)

    ref = phase_encoder_ref(cspecs, w1r, w1i, b1r, b1i, w2r, w2i, b2r, b2i, alpha=0.5)
    assert out.shape == ref.shape == (B, c2, F_, T_)
    np.testing.assert_allclose(np.asarray(out), np.asarray(ref), rtol=2e-4, atol=2e-5)
    print("KERNEL_OK")
</pallas_src>

<mosaic_0001>
module attributes {stable_mosaic.version = 11 : i64} {
  func.func @_phase_encoder_kernel(%arg0: i32, %arg1: i32, %arg2: memref<2x1x2x16x128xf32, #tpu.memory_space<vmem>>, %arg3: memref<24xf32, #tpu.memory_space<smem>>, %arg4: memref<24xf32, #tpu.memory_space<smem>>, %arg5: memref<4xf32, #tpu.memory_space<smem>>, %arg6: memref<4xf32, #tpu.memory_space<smem>>, %arg7: memref<1x4x16x128xf32, #tpu.memory_space<vmem>>) attributes {dimension_semantics = [#tpu.dimension_semantics<parallel>, #tpu.dimension_semantics<parallel>], iteration_bounds = array<i64: 2, 1>, scalar_prefetch = 0 : i64, scratch_operands = 0 : i64, tpu.core_type = #tpu.core_type<tc>, window_params = [{transform_indices = @transform_0, window_bounds = array<i64: 2, 1, 2, 16, 128>}, {transform_indices = @transform_1, window_bounds = array<i64: 24>}, {transform_indices = @transform_2, window_bounds = array<i64: 24>}, {transform_indices = @transform_3, window_bounds = array<i64: 4>}, {transform_indices = @transform_4, window_bounds = array<i64: 4>}, {transform_indices = @transform_5, window_bounds = array<i64: 1, 4, 16, 128>}]} {
    %0 = tpu.iota {dimensions = array<i32: 1>} : vector<16x128xi32>
    %c1_i32 = arith.constant 1 : i32
    %1 = vector.broadcast %c1_i32 : i32 to vector<16x128xi32>
    %2 = arith.cmpi sge, %0, %1 : vector<16x128xi32>
    %c2_i32 = arith.constant 2 : i32
    %3 = vector.broadcast %c2_i32 : i32 to vector<16x128xi32>
    %4 = arith.cmpi sge, %0, %3 : vector<16x128xi32>
    %c0 = arith.constant 0 : index
    %c0_0 = arith.constant 0 : index
    %c0_1 = arith.constant 0 : index
    %c0_2 = arith.constant 0 : index
    %c0_3 = arith.constant 0 : index
    %5 = vector.load %arg2[%c0, %c0_0, %c0_1, %c0_2, %c0_3] : memref<2x1x2x16x128xf32, #tpu.memory_space<vmem>>, vector<1x1x1x16x128xf32>
    %6 = vector.shape_cast %5 : vector<1x1x1x16x128xf32> to vector<16x128xf32>
    %c0_4 = arith.constant 0 : index
    %c0_5 = arith.constant 0 : index
    %c1 = arith.constant 1 : index
    %c0_6 = arith.constant 0 : index
    %c0_7 = arith.constant 0 : index
    %7 = vector.load %arg2[%c0_4, %c0_5, %c1, %c0_6, %c0_7] : memref<2x1x2x16x128xf32, #tpu.memory_space<vmem>>, vector<1x1x1x16x128xf32>
    %8 = vector.shape_cast %7 : vector<1x1x1x16x128xf32> to vector<16x128xf32>
    %c2_i32_8 = arith.constant 2 : i32
    %9 = tpu.dynamic_rotate %6 by %c2_i32_8 dim 1 : vector<16x128xf32>, i32 -> vector<16x128xf32>
    %cst = arith.constant 0.000000e+00 : f32
    %10 = vector.broadcast %cst : f32 to vector<16x128xf32>
    %11 = arith.select %4, %9, %10 : vector<16x128xi1>, vector<16x128xf32>
    %c2_i32_9 = arith.constant 2 : i32
    %12 = tpu.dynamic_rotate %8 by %c2_i32_9 dim 1 : vector<16x128xf32>, i32 -> vector<16x128xf32>
    %cst_10 = arith.constant 0.000000e+00 : f32
    %13 = vector.broadcast %cst_10 : f32 to vector<16x128xf32>
    %14 = arith.select %4, %12, %13 : vector<16x128xi1>, vector<16x128xf32>
    %c1_i32_11 = arith.constant 1 : i32
    %15 = tpu.dynamic_rotate %6 by %c1_i32_11 dim 1 : vector<16x128xf32>, i32 -> vector<16x128xf32>
    %cst_12 = arith.constant 0.000000e+00 : f32
    %16 = vector.broadcast %cst_12 : f32 to vector<16x128xf32>
    %17 = arith.select %2, %15, %16 : vector<16x128xi1>, vector<16x128xf32>
    %c1_i32_13 = arith.constant 1 : i32
    %18 = tpu.dynamic_rotate %8 by %c1_i32_13 dim 1 : vector<16x128xf32>, i32 -> vector<16x128xf32>
    %cst_14 = arith.constant 0.000000e+00 : f32
    %19 = vector.broadcast %cst_14 : f32 to vector<16x128xf32>
    %20 = arith.select %2, %18, %19 : vector<16x128xi1>, vector<16x128xf32>
    %c1_15 = arith.constant 1 : index
    %c0_16 = arith.constant 0 : index
    %c0_17 = arith.constant 0 : index
    %c0_18 = arith.constant 0 : index
    %c0_19 = arith.constant 0 : index
    %21 = vector.load %arg2[%c1_15, %c0_16, %c0_17, %c0_18, %c0_19] : memref<2x1x2x16x128xf32, #tpu.memory_space<vmem>>, vector<1x1x1x16x128xf32>
    %22 = vector.shape_cast %21 : vector<1x1x1x16x128xf32> to vector<16x128xf32>
    %c1_20 = arith.constant 1 : index
    %c0_21 = arith.constant 0 : index
    %c1_22 = arith.constant 1 : index
    %c0_23 = arith.constant 0 : index
    %c0_24 = arith.constant 0 : index
    %23 = vector.load %arg2[%c1_20, %c0_21, %c1_22, %c0_23, %c0_24] : memref<2x1x2x16x128xf32, #tpu.memory_space<vmem>>, vector<1x1x1x16x128xf32>
    %24 = vector.shape_cast %23 : vector<1x1x1x16x128xf32> to vector<16x128xf32>
    %c2_i32_25 = arith.constant 2 : i32
    %25 = tpu.dynamic_rotate %22 by %c2_i32_25 dim 1 : vector<16x128xf32>, i32 -> vector<16x128xf32>
    %cst_26 = arith.constant 0.000000e+00 : f32
    %26 = vector.broadcast %cst_26 : f32 to vector<16x128xf32>
    %27 = arith.select %4, %25, %26 : vector<16x128xi1>, vector<16x128xf32>
    %c2_i32_27 = arith.constant 2 : i32
    %28 = tpu.dynamic_rotate %24 by %c2_i32_27 dim 1 : vector<16x128xf32>, i32 -> vector<16x128xf32>
    %cst_28 = arith.constant 0.000000e+00 : f32
    %29 = vector.broadcast %cst_28 : f32 to vector<16x128xf32>
    %30 = arith.select %4, %28, %29 : vector<16x128xi1>, vector<16x128xf32>
    %c1_i32_29 = arith.constant 1 : i32
    %31 = tpu.dynamic_rotate %22 by %c1_i32_29 dim 1 : vector<16x128xf32>, i32 -> vector<16x128xf32>
    %cst_30 = arith.constant 0.000000e+00 : f32
    %32 = vector.broadcast %cst_30 : f32 to vector<16x128xf32>
    %33 = arith.select %2, %31, %32 : vector<16x128xi1>, vector<16x128xf32>
    %c1_i32_31 = arith.constant 1 : i32
    %34 = tpu.dynamic_rotate %24 by %c1_i32_31 dim 1 : vector<16x128xf32>, i32 -> vector<16x128xf32>
    %cst_32 = arith.constant 0.000000e+00 : f32
    %35 = vector.broadcast %cst_32 : f32 to vector<16x128xf32>
    %36 = arith.select %2, %34, %35 : vector<16x128xi1>, vector<16x128xf32>
    %c0_33 = arith.constant 0 : index
    %37 = memref.load %arg3[%c0_33] : memref<24xf32, #tpu.memory_space<smem>>
    %c0_34 = arith.constant 0 : index
    %38 = memref.load %arg4[%c0_34] : memref<24xf32, #tpu.memory_space<smem>>
    %39 = vector.broadcast %37 : f32 to vector<16x128xf32>
    %40 = arith.mulf %39, %11 : vector<16x128xf32>
    %41 = vector.broadcast %38 : f32 to vector<16x128xf32>
    %42 = arith.mulf %41, %14 : vector<16x128xf32>
    %43 = arith.subf %40, %42 : vector<16x128xf32>
    %44 = vector.broadcast %38 : f32 to vector<16x128xf32>
    %45 = arith.mulf %44, %11 : vector<16x128xf32>
    %46 = vector.broadcast %37 : f32 to vector<16x128xf32>
    %47 = arith.mulf %46, %14 : vector<16x128xf32>
    %48 = arith.addf %45, %47 : vector<16x128xf32>
    %c1_35 = arith.constant 1 : index
    %49 = memref.load %arg3[%c1_35] : memref<24xf32, #tpu.memory_space<smem>>
    %c1_36 = arith.constant 1 : index
    %50 = memref.load %arg4[%c1_36] : memref<24xf32, #tpu.memory_space<smem>>
    %51 = vector.broadcast %49 : f32 to vector<16x128xf32>
    %52 = arith.mulf %51, %17 : vector<16x128xf32>
    %53 = vector.broadcast %50 : f32 to vector<16x128xf32>
    %54 = arith.mulf %53, %20 : vector<16x128xf32>
    %55 = arith.subf %52, %54 : vector<16x128xf32>
    %56 = vector.broadcast %50 : f32 to vector<16x128xf32>
    %57 = arith.mulf %56, %17 : vector<16x128xf32>
    %58 = vector.broadcast %49 : f32 to vector<16x128xf32>
    %59 = arith.mulf %58, %20 : vector<16x128xf32>
    %60 = arith.addf %57, %59 : vector<16x128xf32>
    %61 = arith.addf %43, %55 : vector<16x128xf32>
    %62 = arith.addf %48, %60 : vector<16x128xf32>
    %c2 = arith.constant 2 : index
    %63 = memref.load %arg3[%c2] : memref<24xf32, #tpu.memory_space<smem>>
    %c2_37 = arith.constant 2 : index
    %64 = memref.load %arg4[%c2_37] : memref<24xf32, #tpu.memory_space<smem>>
    %65 = vector.broadcast %63 : f32 to vector<16x128xf32>
    %66 = arith.mulf %65, %6 : vector<16x128xf32>
    %67 = vector.broadcast %64 : f32 to vector<16x128xf32>
    %68 = arith.mulf %67, %8 : vector<16x128xf32>
    %69 = arith.subf %66, %68 : vector<16x128xf32>
    %70 = vector.broadcast %64 : f32 to vector<16x128xf32>
    %71 = arith.mulf %70, %6 : vector<16x128xf32>
    %72 = vector.broadcast %63 : f32 to vector<16x128xf32>
    %73 = arith.mulf %72, %8 : vector<16x128xf32>
    %74 = arith.addf %71, %73 : vector<16x128xf32>
    %75 = arith.addf %61, %69 : vector<16x128xf32>
    %76 = arith.addf %62, %74 : vector<16x128xf32>
    %c3 = arith.constant 3 : index
    %77 = memref.load %arg3[%c3] : memref<24xf32, #tpu.memory_space<smem>>
    %c3_38 = arith.constant 3 : index
    %78 = memref.load %arg4[%c3_38] : memref<24xf32, #tpu.memory_space<smem>>
    %79 = vector.broadcast %77 : f32 to vector<16x128xf32>
    %80 = arith.mulf %79, %27 : vector<16x128xf32>
    %81 = vector.broadcast %78 : f32 to vector<16x128xf32>
    %82 = arith.mulf %81, %30 : vector<16x128xf32>
    %83 = arith.subf %80, %82 : vector<16x128xf32>
    %84 = vector.broadcast %78 : f32 to vector<16x128xf32>
    %85 = arith.mulf %84, %27 : vector<16x128xf32>
    %86 = vector.broadcast %77 : f32 to vector<16x128xf32>
    %87 = arith.mulf %86, %30 : vector<16x128xf32>
    %88 = arith.addf %85, %87 : vector<16x128xf32>
    %89 = arith.addf %75, %83 : vector<16x128xf32>
    %90 = arith.addf %76, %88 : vector<16x128xf32>
    %c4 = arith.constant 4 : index
    %91 = memref.load %arg3[%c4] : memref<24xf32, #tpu.memory_space<smem>>
    %c4_39 = arith.constant 4 : index
    %92 = memref.load %arg4[%c4_39] : memref<24xf32, #tpu.memory_space<smem>>
    %93 = vector.broadcast %91 : f32 to vector<16x128xf32>
    %94 = arith.mulf %93, %33 : vector<16x128xf32>
    %95 = vector.broadcast %92 : f32 to vector<16x128xf32>
    %96 = arith.mulf %95, %36 : vector<16x128xf32>
    %97 = arith.subf %94, %96 : vector<16x128xf32>
    %98 = vector.broadcast %92 : f32 to vector<16x128xf32>
    %99 = arith.mulf %98, %33 : vector<16x128xf32>
    %100 = vector.broadcast %91 : f32 to vector<16x128xf32>
    %101 = arith.mulf %100, %36 : vector<16x128xf32>
    %102 = arith.addf %99, %101 : vector<16x128xf32>
    %103 = arith.addf %89, %97 : vector<16x128xf32>
    %104 = arith.addf %90, %102 : vector<16x128xf32>
    %c5 = arith.constant 5 : index
    %105 = memref.load %arg3[%c5] : memref<24xf32, #tpu.memory_space<smem>>
    %c5_40 = arith.constant 5 : index
    %106 = memref.load %arg4[%c5_40] : memref<24xf32, #tpu.memory_space<smem>>
    %107 = vector.broadcast %105 : f32 to vector<16x128xf32>
    %108 = arith.mulf %107, %22 : vector<16x128xf32>
    %109 = vector.broadcast %106 : f32 to vector<16x128xf32>
    %110 = arith.mulf %109, %24 : vector<16x128xf32>
    %111 = arith.subf %108, %110 : vector<16x128xf32>
    %112 = vector.broadcast %106 : f32 to vector<16x128xf32>
    %113 = arith.mulf %112, %22 : vector<16x128xf32>
    %114 = vector.broadcast %105 : f32 to vector<16x128xf32>
    %115 = arith.mulf %114, %24 : vector<16x128xf32>
    %116 = arith.addf %113, %115 : vector<16x128xf32>
    %117 = arith.addf %103, %111 : vector<16x128xf32>
    %118 = arith.addf %104, %116 : vector<16x128xf32>
    %c0_41 = arith.constant 0 : index
    %119 = memref.load %arg5[%c0_41] : memref<4xf32, #tpu.memory_space<smem>>
    %120 = vector.broadcast %119 : f32 to vector<16x128xf32>
    %121 = arith.addf %117, %120 : vector<16x128xf32>
    %c0_42 = arith.constant 0 : index
    %122 = memref.load %arg6[%c0_42] : memref<4xf32, #tpu.memory_space<smem>>
    %123 = vector.broadcast %122 : f32 to vector<16x128xf32>
    %124 = arith.addf %118, %123 : vector<16x128xf32>
    %125 = arith.mulf %121, %121 : vector<16x128xf32>
    %126 = arith.mulf %124, %124 : vector<16x128xf32>
    %127 = arith.addf %125, %126 : vector<16x128xf32>
    %cst_43 = arith.constant 9.99999993E-9 : f32
    %128 = vector.broadcast %cst_43 : f32 to vector<16x128xf32>
    %129 = arith.addf %127, %128 : vector<16x128xf32>
    %130 = math.sqrt %129 : vector<16x128xf32>
    %131 = math.sqrt %130 : vector<16x128xf32>
    %c0_44 = arith.constant 0 : index
    %c0_45 = arith.constant 0 : index
    %c0_46 = arith.constant 0 : index
    %c0_47 = arith.constant 0 : index
    %132 = vector.load %arg7[%c0_44, %c0_45, %c0_46, %c0_47] : memref<1x4x16x128xf32, #tpu.memory_space<vmem>>, vector<1x1x16x128xf32>
    %133 = vector.shape_cast %132 : vector<1x1x16x128xf32> to vector<16x128xf32>
    %134 = vector.shape_cast %131 : vector<16x128xf32> to vector<1x1x16x128xf32>
    tpu.vector_store %arg7[%c0_44, %c0_45, %c0_46, %c0_47], %134 {strides = array<i32>} : memref<1x4x16x128xf32, #tpu.memory_space<vmem>>, vector<1x1x16x128xf32>,
    %c6 = arith.constant 6 : index
    %135 = memref.load %arg3[%c6] : memref<24xf32, #tpu.memory_space<smem>>
    %c6_48 = arith.constant 6 : index
    %136 = memref.load %arg4[%c6_48] : memref<24xf32, #tpu.memory_space<smem>>
    %137 = vector.broadcast %135 : f32 to vector<16x128xf32>
    %138 = arith.mulf %137, %11 : vector<16x128xf32>
    %139 = vector.broadcast %136 : f32 to vector<16x128xf32>
    %140 = arith.mulf %139, %14 : vector<16x128xf32>
    %141 = arith.subf %138, %140 : vector<16x128xf32>
    %142 = vector.broadcast %136 : f32 to vector<16x128xf32>
    %143 = arith.mulf %142, %11 : vector<16x128xf32>
    %144 = vector.broadcast %135 : f32 to vector<16x128xf32>
    %145 = arith.mulf %144, %14 : vector<16x128xf32>
    %146 = arith.addf %143, %145 : vector<16x128xf32>
    %c7 = arith.constant 7 : index
    %147 = memref.load %arg3[%c7] : memref<24xf32, #tpu.memory_space<smem>>
    %c7_49 = arith.constant 7 : index
    %148 = memref.load %arg4[%c7_49] : memref<24xf32, #tpu.memory_space<smem>>
    %149 = vector.broadcast %147 : f32 to vector<16x128xf32>
    %150 = arith.mulf %149, %17 : vector<16x128xf32>
    %151 = vector.broadcast %148 : f32 to vector<16x128xf32>
    %152 = arith.mulf %151, %20 : vector<16x128xf32>
    %153 = arith.subf %150, %152 : vector<16x128xf32>
    %154 = vector.broadcast %148 : f32 to vector<16x128xf32>
    %155 = arith.mulf %154, %17 : vector<16x128xf32>
    %156 = vector.broadcast %147 : f32 to vector<16x128xf32>
    %157 = arith.mulf %156, %20 : vector<16x128xf32>
    %158 = arith.addf %155, %157 : vector<16x128xf32>
    %159 = arith.addf %141, %153 : vector<16x128xf32>
    %160 = arith.addf %146, %158 : vector<16x128xf32>
    %c8 = arith.constant 8 : index
    %161 = memref.load %arg3[%c8] : memref<24xf32, #tpu.memory_space<smem>>
    %c8_50 = arith.constant 8 : index
    %162 = memref.load %arg4[%c8_50] : memref<24xf32, #tpu.memory_space<smem>>
    %163 = vector.broadcast %161 : f32 to vector<16x128xf32>
    %164 = arith.mulf %163, %6 : vector<16x128xf32>
    %165 = vector.broadcast %162 : f32 to vector<16x128xf32>
    %166 = arith.mulf %165, %8 : vector<16x128xf32>
    %167 = arith.subf %164, %166 : vector<16x128xf32>
    %168 = vector.broadcast %162 : f32 to vector<16x128xf32>
    %169 = arith.mulf %168, %6 : vector<16x128xf32>
    %170 = vector.broadcast %161 : f32 to vector<16x128xf32>
    %171 = arith.mulf %170, %8 : vector<16x128xf32>
    %172 = arith.addf %169, %171 : vector<16x128xf32>
    %173 = arith.addf %159, %167 : vector<16x128xf32>
    %174 = arith.addf %160, %172 : vector<16x128xf32>
    %c9 = arith.constant 9 : index
    %175 = memref.load %arg3[%c9] : memref<24xf32, #tpu.memory_space<smem>>
    %c9_51 = arith.constant 9 : index
    %176 = memref.load %arg4[%c9_51] : memref<24xf32, #tpu.memory_space<smem>>
    %177 = vector.broadcast %175 : f32 to vector<16x128xf32>
    %178 = arith.mulf %177, %27 : vector<16x128xf32>
    %179 = vector.broadcast %176 : f32 to vector<16x128xf32>
    %180 = arith.mulf %179, %30 : vector<16x128xf32>
    %181 = arith.subf %178, %180 : vector<16x128xf32>
    %182 = vector.broadcast %176 : f32 to vector<16x128xf32>
    %183 = arith.mulf %182, %27 : vector<16x128xf32>
    %184 = vector.broadcast %175 : f32 to vector<16x128xf32>
    %185 = arith.mulf %184, %30 : vector<16x128xf32>
    %186 = arith.addf %183, %185 : vector<16x128xf32>
    %187 = arith.addf %173, %181 : vector<16x128xf32>
    %188 = arith.addf %174, %186 : vector<16x128xf32>
    %c10 = arith.constant 10 : index
    %189 = memref.load %arg3[%c10] : memref<24xf32, #tpu.memory_space<smem>>
    %c10_52 = arith.constant 10 : index
    %190 = memref.load %arg4[%c10_52] : memref<24xf32, #tpu.memory_space<smem>>
    %191 = vector.broadcast %189 : f32 to vector<16x128xf32>
    %192 = arith.mulf %191, %33 : vector<16x128xf32>
    %193 = vector.broadcast %190 : f32 to vector<16x128xf32>
    %194 = arith.mulf %193, %36 : vector<16x128xf32>
    %195 = arith.subf %192, %194 : vector<16x128xf32>
    %196 = vector.broadcast %190 : f32 to vector<16x128xf32>
    %197 = arith.mulf %196, %33 : vector<16x128xf32>
    %198 = vector.broadcast %189 : f32 to vector<16x128xf32>
    %199 = arith.mulf %198, %36 : vector<16x128xf32>
    %200 = arith.addf %197, %199 : vector<16x128xf32>
    %201 = arith.addf %187, %195 : vector<16x128xf32>
    %202 = arith.addf %188, %200 : vector<16x128xf32>
    %c11 = arith.constant 11 : index
    %203 = memref.load %arg3[%c11] : memref<24xf32, #tpu.memory_space<smem>>
    %c11_53 = arith.constant 11 : index
    %204 = memref.load %arg4[%c11_53] : memref<24xf32, #tpu.memory_space<smem>>
    %205 = vector.broadcast %203 : f32 to vector<16x128xf32>
    %206 = arith.mulf %205, %22 : vector<16x128xf32>
    %207 = vector.broadcast %204 : f32 to vector<16x128xf32>
    %208 = arith.mulf %207, %24 : vector<16x128xf32>
    %209 = arith.subf %206, %208 : vector<16x128xf32>
    %210 = vector.broadcast %204 : f32 to vector<16x128xf32>
    %211 = arith.mulf %210, %22 : vector<16x128xf32>
    %212 = vector.broadcast %203 : f32 to vector<16x128xf32>
    %213 = arith.mulf %212, %24 : vector<16x128xf32>
    %214 = arith.addf %211, %213 : vector<16x128xf32>
    %215 = arith.addf %201, %209 : vector<16x128xf32>
    %216 = arith.addf %202, %214 : vector<16x128xf32>
    %c1_54 = arith.constant 1 : index
    %217 = memref.load %arg5[%c1_54] : memref<4xf32, #tpu.memory_space<smem>>
    %218 = vector.broadcast %217 : f32 to vector<16x128xf32>
    %219 = arith.addf %215, %218 : vector<16x128xf32>
    %c1_55 = arith.constant 1 : index
    %220 = memref.load %arg6[%c1_55] : memref<4xf32, #tpu.memory_space<smem>>
    %221 = vector.broadcast %220 : f32 to vector<16x128xf32>
    %222 = arith.addf %216, %221 : vector<16x128xf32>
    %223 = arith.mulf %219, %219 : vector<16x128xf32>
    %224 = arith.mulf %222, %222 : vector<16x128xf32>
    %225 = arith.addf %223, %224 : vector<16x128xf32>
    %cst_56 = arith.constant 9.99999993E-9 : f32
    %226 = vector.broadcast %cst_56 : f32 to vector<16x128xf32>
    %227 = arith.addf %225, %226 : vector<16x128xf32>
    %228 = math.sqrt %227 : vector<16x128xf32>
    %229 = math.sqrt %228 : vector<16x128xf32>
    %c0_57 = arith.constant 0 : index
    %c1_58 = arith.constant 1 : index
    %c0_59 = arith.constant 0 : index
    %c0_60 = arith.constant 0 : index
    %230 = vector.load %arg7[%c0_57, %c1_58, %c0_59, %c0_60] : memref<1x4x16x128xf32, #tpu.memory_space<vmem>>, vector<1x1x16x128xf32>
    %231 = vector.shape_cast %230 : vector<1x1x16x128xf32> to vector<16x128xf32>
    %232 = vector.shape_cast %229 : vector<16x128xf32> to vector<1x1x16x128xf32>
    tpu.vector_store %arg7[%c0_57, %c1_58, %c0_59, %c0_60], %232 {strides = array<i32>} : memref<1x4x16x128xf32, #tpu.memory_space<vmem>>, vector<1x1x16x128xf32>,
    %c12 = arith.constant 12 : index
    %233 = memref.load %arg3[%c12] : memref<24xf32, #tpu.memory_space<smem>>
    %c12_61 = arith.constant 12 : index
    %234 = memref.load %arg4[%c12_61] : memref<24xf32, #tpu.memory_space<smem>>
    %235 = vector.broadcast %233 : f32 to vector<16x128xf32>
    %236 = arith.mulf %235, %11 : vector<16x128xf32>
    %237 = vector.broadcast %234 : f32 to vector<16x128xf32>
    %238 = arith.mulf %237, %14 : vector<16x128xf32>
    %239 = arith.subf %236, %238 : vector<16x128xf32>
    %240 = vector.broadcast %234 : f32 to vector<16x128xf32>
    %241 = arith.mulf %240, %11 : vector<16x128xf32>
    %242 = vector.broadcast %233 : f32 to vector<16x128xf32>
    %243 = arith.mulf %242, %14 : vector<16x128xf32>
    %244 = arith.addf %241, %243 : vector<16x128xf32>
    %c13 = arith.constant 13 : index
    %245 = memref.load %arg3[%c13] : memref<24xf32, #tpu.memory_space<smem>>
    %c13_62 = arith.constant 13 : index
    %246 = memref.load %arg4[%c13_62] : memref<24xf32, #tpu.memory_space<smem>>
    %247 = vector.broadcast %245 : f32 to vector<16x128xf32>
    %248 = arith.mulf %247, %17 : vector<16x128xf32>
    %249 = vector.broadcast %246 : f32 to vector<16x128xf32>
    %250 = arith.mulf %249, %20 : vector<16x128xf32>
    %251 = arith.subf %248, %250 : vector<16x128xf32>
    %252 = vector.broadcast %246 : f32 to vector<16x128xf32>
    %253 = arith.mulf %252, %17 : vector<16x128xf32>
    %254 = vector.broadcast %245 : f32 to vector<16x128xf32>
    %255 = arith.mulf %254, %20 : vector<16x128xf32>
    %256 = arith.addf %253, %255 : vector<16x128xf32>
    %257 = arith.addf %239, %251 : vector<16x128xf32>
    %258 = arith.addf %244, %256 : vector<16x128xf32>
    %c14 = arith.constant 14 : index
    %259 = memref.load %arg3[%c14] : memref<24xf32, #tpu.memory_space<smem>>
    %c14_63 = arith.constant 14 : index
    %260 = memref.load %arg4[%c14_63] : memref<24xf32, #tpu.memory_space<smem>>
    %261 = vector.broadcast %259 : f32 to vector<16x128xf32>
    %262 = arith.mulf %261, %6 : vector<16x128xf32>
    %263 = vector.broadcast %260 : f32 to vector<16x128xf32>
    %264 = arith.mulf %263, %8 : vector<16x128xf32>
    %265 = arith.subf %262, %264 : vector<16x128xf32>
    %266 = vector.broadcast %260 : f32 to vector<16x128xf32>
    %267 = arith.mulf %266, %6 : vector<16x128xf32>
    %268 = vector.broadcast %259 : f32 to vector<16x128xf32>
    %269 = arith.mulf %268, %8 : vector<16x128xf32>
    %270 = arith.addf %267, %269 : vector<16x128xf32>
    %271 = arith.addf %257, %265 : vector<16x128xf32>
    %272 = arith.addf %258, %270 : vector<16x128xf32>
    %c15 = arith.constant 15 : index
    %273 = memref.load %arg3[%c15] : memref<24xf32, #tpu.memory_space<smem>>
    %c15_64 = arith.constant 15 : index
    %274 = memref.load %arg4[%c15_64] : memref<24xf32, #tpu.memory_space<smem>>
    %275 = vector.broadcast %273 : f32 to vector<16x128xf32>
    %276 = arith.mulf %275, %27 : vector<16x128xf32>
    %277 = vector.broadcast %274 : f32 to vector<16x128xf32>
    %278 = arith.mulf %277, %30 : vector<16x128xf32>
    %279 = arith.subf %276, %278 : vector<16x128xf32>
    %280 = vector.broadcast %274 : f32 to vector<16x128xf32>
    %281 = arith.mulf %280, %27 : vector<16x128xf32>
    %282 = vector.broadcast %273 : f32 to vector<16x128xf32>
    %283 = arith.mulf %282, %30 : vector<16x128xf32>
    %284 = arith.addf %281, %283 : vector<16x128xf32>
    %285 = arith.addf %271, %279 : vector<16x128xf32>
    %286 = arith.addf %272, %284 : vector<16x128xf32>
    %c16 = arith.constant 16 : index
    %287 = memref.load %arg3[%c16] : memref<24xf32, #tpu.memory_space<smem>>
    %c16_65 = arith.constant 16 : index
    %288 = memref.load %arg4[%c16_65] : memref<24xf32, #tpu.memory_space<smem>>
    %289 = vector.broadcast %287 : f32 to vector<16x128xf32>
    %290 = arith.mulf %289, %33 : vector<16x128xf32>
    %291 = vector.broadcast %288 : f32 to vector<16x128xf32>
    %292 = arith.mulf %291, %36 : vector<16x128xf32>
    %293 = arith.subf %290, %292 : vector<16x128xf32>
    %294 = vector.broadcast %288 : f32 to vector<16x128xf32>
    %295 = arith.mulf %294, %33 : vector<16x128xf32>
    %296 = vector.broadcast %287 : f32 to vector<16x128xf32>
    %297 = arith.mulf %296, %36 : vector<16x128xf32>
    %298 = arith.addf %295, %297 : vector<16x128xf32>
    %299 = arith.addf %285, %293 : vector<16x128xf32>
    %300 = arith.addf %286, %298 : vector<16x128xf32>
    %c17 = arith.constant 17 : index
    %301 = memref.load %arg3[%c17] : memref<24xf32, #tpu.memory_space<smem>>
    %c17_66 = arith.constant 17 : index
    %302 = memref.load %arg4[%c17_66] : memref<24xf32, #tpu.memory_space<smem>>
    %303 = vector.broadcast %301 : f32 to vector<16x128xf32>
    %304 = arith.mulf %303, %22 : vector<16x128xf32>
    %305 = vector.broadcast %302 : f32 to vector<16x128xf32>
    %306 = arith.mulf %305, %24 : vector<16x128xf32>
    %307 = arith.subf %304, %306 : vector<16x128xf32>
    %308 = vector.broadcast %302 : f32 to vector<16x128xf32>
    %309 = arith.mulf %308, %22 : vector<16x128xf32>
    %310 = vector.broadcast %301 : f32 to vector<16x128xf32>
    %311 = arith.mulf %310, %24 : vector<16x128xf32>
    %312 = arith.addf %309, %311 : vector<16x128xf32>
    %313 = arith.addf %299, %307 : vector<16x128xf32>
    %314 = arith.addf %300, %312 : vector<16x128xf32>
    %c2_67 = arith.constant 2 : index
    %315 = memref.load %arg5[%c2_67] : memref<4xf32, #tpu.memory_space<smem>>
    %316 = vector.broadcast %315 : f32 to vector<16x128xf32>
    %317 = arith.addf %313, %316 : vector<16x128xf32>
    %c2_68 = arith.constant 2 : index
    %318 = memref.load %arg6[%c2_68] : memref<4xf32, #tpu.memory_space<smem>>
    %319 = vector.broadcast %318 : f32 to vector<16x128xf32>
    %320 = arith.addf %314, %319 : vector<16x128xf32>
    %321 = arith.mulf %317, %317 : vector<16x128xf32>
    %322 = arith.mulf %320, %320 : vector<16x128xf32>
    %323 = arith.addf %321, %322 : vector<16x128xf32>
    %cst_69 = arith.constant 9.99999993E-9 : f32
    %324 = vector.broadcast %cst_69 : f32 to vector<16x128xf32>
    %325 = arith.addf %323, %324 : vector<16x128xf32>
    %326 = math.sqrt %325 : vector<16x128xf32>
    %327 = math.sqrt %326 : vector<16x128xf32>
    %c0_70 = arith.constant 0 : index
    %c2_71 = arith.constant 2 : index
    %c0_72 = arith.constant 0 : index
    %c0_73 = arith.constant 0 : index
    %328 = vector.load %arg7[%c0_70, %c2_71, %c0_72, %c0_73] : memref<1x4x16x128xf32, #tpu.memory_space<vmem>>, vector<1x1x16x128xf32>
    %329 = vector.shape_cast %328 : vector<1x1x16x128xf32> to vector<16x128xf32>
    %330 = vector.shape_cast %327 : vector<16x128xf32> to vector<1x1x16x128xf32>
    tpu.vector_store %arg7[%c0_70, %c2_71, %c0_72, %c0_73], %330 {strides = array<i32>} : memref<1x4x16x128xf32, #tpu.memory_space<vmem>>, vector<1x1x16x128xf32>,
    %c18 = arith.constant 18 : index
    %331 = memref.load %arg3[%c18] : memref<24xf32, #tpu.memory_space<smem>>
    %c18_74 = arith.constant 18 : index
    %332 = memref.load %arg4[%c18_74] : memref<24xf32, #tpu.memory_space<smem>>
    %333 = vector.broadcast %331 : f32 to vector<16x128xf32>
    %334 = arith.mulf %333, %11 : vector<16x128xf32>
    %335 = vector.broadcast %332 : f32 to vector<16x128xf32>
    %336 = arith.mulf %335, %14 : vector<16x128xf32>
    %337 = arith.subf %334, %336 : vector<16x128xf32>
    %338 = vector.broadcast %332 : f32 to vector<16x128xf32>
    %339 = arith.mulf %338, %11 : vector<16x128xf32>
    %340 = vector.broadcast %331 : f32 to vector<16x128xf32>
    %341 = arith.mulf %340, %14 : vector<16x128xf32>
    %342 = arith.addf %339, %341 : vector<16x128xf32>
    %c19 = arith.constant 19 : index
    %343 = memref.load %arg3[%c19] : memref<24xf32, #tpu.memory_space<smem>>
    %c19_75 = arith.constant 19 : index
    %344 = memref.load %arg4[%c19_75] : memref<24xf32, #tpu.memory_space<smem>>
    %345 = vector.broadcast %343 : f32 to vector<16x128xf32>
    %346 = arith.mulf %345, %17 : vector<16x128xf32>
    %347 = vector.broadcast %344 : f32 to vector<16x128xf32>
    %348 = arith.mulf %347, %20 : vector<16x128xf32>
    %349 = arith.subf %346, %348 : vector<16x128xf32>
    %350 = vector.broadcast %344 : f32 to vector<16x128xf32>
    %351 = arith.mulf %350, %17 : vector<16x128xf32>
    %352 = vector.broadcast %343 : f32 to vector<16x128xf32>
    %353 = arith.mulf %352, %20 : vector<16x128xf32>
    %354 = arith.addf %351, %353 : vector<16x128xf32>
    %355 = arith.addf %337, %349 : vector<16x128xf32>
    %356 = arith.addf %342, %354 : vector<16x128xf32>
    %c20 = arith.constant 20 : index
    %357 = memref.load %arg3[%c20] : memref<24xf32, #tpu.memory_space<smem>>
    %c20_76 = arith.constant 20 : index
    %358 = memref.load %arg4[%c20_76] : memref<24xf32, #tpu.memory_space<smem>>
    %359 = vector.broadcast %357 : f32 to vector<16x128xf32>
    %360 = arith.mulf %359, %6 : vector<16x128xf32>
    %361 = vector.broadcast %358 : f32 to vector<16x128xf32>
    %362 = arith.mulf %361, %8 : vector<16x128xf32>
    %363 = arith.subf %360, %362 : vector<16x128xf32>
    %364 = vector.broadcast %358 : f32 to vector<16x128xf32>
    %365 = arith.mulf %364, %6 : vector<16x128xf32>
    %366 = vector.broadcast %357 : f32 to vector<16x128xf32>
    %367 = arith.mulf %366, %8 : vector<16x128xf32>
    %368 = arith.addf %365, %367 : vector<16x128xf32>
    %369 = arith.addf %355, %363 : vector<16x128xf32>
    %370 = arith.addf %356, %368 : vector<16x128xf32>
    %c21 = arith.constant 21 : index
    %371 = memref.load %arg3[%c21] : memref<24xf32, #tpu.memory_space<smem>>
    %c21_77 = arith.constant 21 : index
    %372 = memref.load %arg4[%c21_77] : memref<24xf32, #tpu.memory_space<smem>>
    %373 = vector.broadcast %371 : f32 to vector<16x128xf32>
    %374 = arith.mulf %373, %27 : vector<16x128xf32>
    %375 = vector.broadcast %372 : f32 to vector<16x128xf32>
    %376 = arith.mulf %375, %30 : vector<16x128xf32>
    %377 = arith.subf %374, %376 : vector<16x128xf32>
    %378 = vector.broadcast %372 : f32 to vector<16x128xf32>
    %379 = arith.mulf %378, %27 : vector<16x128xf32>
    %380 = vector.broadcast %371 : f32 to vector<16x128xf32>
    %381 = arith.mulf %380, %30 : vector<16x128xf32>
    %382 = arith.addf %379, %381 : vector<16x128xf32>
    %383 = arith.addf %369, %377 : vector<16x128xf32>
    %384 = arith.addf %370, %382 : vector<16x128xf32>
    %c22 = arith.constant 22 : index
    %385 = memref.load %arg3[%c22] : memref<24xf32, #tpu.memory_space<smem>>
    %c22_78 = arith.constant 22 : index
    %386 = memref.load %arg4[%c22_78] : memref<24xf32, #tpu.memory_space<smem>>
    %387 = vector.broadcast %385 : f32 to vector<16x128xf32>
    %388 = arith.mulf %387, %33 : vector<16x128xf32>
    %389 = vector.broadcast %386 : f32 to vector<16x128xf32>
    %390 = arith.mulf %389, %36 : vector<16x128xf32>
    %391 = arith.subf %388, %390 : vector<16x128xf32>
    %392 = vector.broadcast %386 : f32 to vector<16x128xf32>
    %393 = arith.mulf %392, %33 : vector<16x128xf32>
    %394 = vector.broadcast %385 : f32 to vector<16x128xf32>
    %395 = arith.mulf %394, %36 : vector<16x128xf32>
    %396 = arith.addf %393, %395 : vector<16x128xf32>
    %397 = arith.addf %383, %391 : vector<16x128xf32>
    %398 = arith.addf %384, %396 : vector<16x128xf32>
    %c23 = arith.constant 23 : index
    %399 = memref.load %arg3[%c23] : memref<24xf32, #tpu.memory_space<smem>>
    %c23_79 = arith.constant 23 : index
    %400 = memref.load %arg4[%c23_79] : memref<24xf32, #tpu.memory_space<smem>>
    %401 = vector.broadcast %399 : f32 to vector<16x128xf32>
    %402 = arith.mulf %401, %22 : vector<16x128xf32>
    %403 = vector.broadcast %400 : f32 to vector<16x128xf32>
    %404 = arith.mulf %403, %24 : vector<16x128xf32>
    %405 = arith.subf %402, %404 : vector<16x128xf32>
    %406 = vector.broadcast %400 : f32 to vector<16x128xf32>
    %407 = arith.mulf %406, %22 : vector<16x128xf32>
    %408 = vector.broadcast %399 : f32 to vector<16x128xf32>
    %409 = arith.mulf %408, %24 : vector<16x128xf32>
    %410 = arith.addf %407, %409 : vector<16x128xf32>
    %411 = arith.addf %397, %405 : vector<16x128xf32>
    %412 = arith.addf %398, %410 : vector<16x128xf32>
    %c3_80 = arith.constant 3 : index
    %413 = memref.load %arg5[%c3_80] : memref<4xf32, #tpu.memory_space<smem>>
    %414 = vector.broadcast %413 : f32 to vector<16x128xf32>
    %415 = arith.addf %411, %414 : vector<16x128xf32>
    %c3_81 = arith.constant 3 : index
    %416 = memref.load %arg6[%c3_81] : memref<4xf32, #tpu.memory_space<smem>>
    %417 = vector.broadcast %416 : f32 to vector<16x128xf32>
    %418 = arith.addf %412, %417 : vector<16x128xf32>
    %419 = arith.mulf %415, %415 : vector<16x128xf32>
    %420 = arith.mulf %418, %418 : vector<16x128xf32>
    %421 = arith.addf %419, %420 : vector<16x128xf32>
    %cst_82 = arith.constant 9.99999993E-9 : f32
    %422 = vector.broadcast %cst_82 : f32 to vector<16x128xf32>
    %423 = arith.addf %421, %422 : vector<16x128xf32>
    %424 = math.sqrt %423 : vector<16x128xf32>
    %425 = math.sqrt %424 : vector<16x128xf32>
    %c0_83 = arith.constant 0 : index
    %c3_84 = arith.constant 3 : index
    %c0_85 = arith.constant 0 : index
    %c0_86 = arith.constant 0 : index
    %426 = vector.load %arg7[%c0_83, %c3_84, %c0_85, %c0_86] : memref<1x4x16x128xf32, #tpu.memory_space<vmem>>, vector<1x1x16x128xf32>
    %427 = vector.shape_cast %426 : vector<1x1x16x128xf32> to vector<16x128xf32>
    %428 = vector.shape_cast %425 : vector<16x128xf32> to vector<1x1x16x128xf32>
    tpu.vector_store %arg7[%c0_83, %c3_84, %c0_85, %c0_86], %428 {strides = array<i32>} : memref<1x4x16x128xf32, #tpu.memory_space<vmem>>, vector<1x1x16x128xf32>,
    return
  }
  func.func @transform_0(%arg0: i32, %arg1: i32) -> (i32, i32, i32, i32, i32) {
    %c0_i32 = arith.constant 0 : i32
    %c0_i32_0 = arith.constant 0 : i32
    %c0_i32_1 = arith.constant 0 : i32
    %c0_i32_2 = arith.constant 0 : i32
    return %c0_i32, %arg0, %c0_i32_0, %arg1, %c0_i32_1 : i32, i32, i32, i32, i32
  }
  func.func @transform_1(%arg0: i32, %arg1: i32) -> i32 {
    %c0_i32 = arith.constant 0 : i32
    %c0_i32_0 = arith.constant 0 : i32
    return %c0_i32 : i32
  }
  func.func @transform_2(%arg0: i32, %arg1: i32) -> i32 {
    %c0_i32 = arith.constant 0 : i32
    %c0_i32_0 = arith.constant 0 : i32
    return %c0_i32 : i32
  }
  func.func @transform_3(%arg0: i32, %arg1: i32) -> i32 {
    %c0_i32 = arith.constant 0 : i32
    %c0_i32_0 = arith.constant 0 : i32
    return %c0_i32 : i32
  }
  func.func @transform_4(%arg0: i32, %arg1: i32) -> i32 {
    %c0_i32 = arith.constant 0 : i32
    %c0_i32_0 = arith.constant 0 : i32
    return %c0_i32 : i32
  }
  func.func @transform_5(%arg0: i32, %arg1: i32) -> (i32, i32, i32, i32) {
    %c0_i32 = arith.constant 0 : i32
    %c0_i32_0 = arith.constant 0 : i32
    %c0_i32_1 = arith.constant 0 : i32
    return %arg0, %c0_i32, %arg1, %c0_i32_0 : i32, i32, i32, i32
  }
}

</mosaic_0001>

<llo_original>
// kernel: tpu_custom_call.1
$region0: #{tpu_custom_call.1}
  #allocation0 [shape = 'u32[]', space=smem, size = 0x4, offset = 0x4, fixed_abs, tag = 'smem constant byte address 0x4 - core index']
  #allocation1 [shape = 'u32[72,128]{1,0:T(1,128)}', space=vmem, size = 0x9000, scoped, tag = 'internal scratch']
  #allocation13 [shape = 's32[]', space=sflag, size = 0x4, offset = 0, fixed_abs, tag = 'sflag constant byte address 0x0 - dummy sync flag']
  %s0 = inlined_call_operand.hbm [shape: f32[2,2,2,16,128], index: 0, kind: input, shape index: {}]
  %s1 = inlined_call_operand.hbm [shape: f32[24], index: 1, kind: input, shape index: {}]
  %s2 = inlined_call_operand.vmem [shape: f32[24], index: 2, kind: input, shape index: {}]
  %s3 = inlined_call_operand.vmem [shape: f32[4], index: 3, kind: input, shape index: {}]
  %s4 = inlined_call_operand.vmem [shape: f32[4], index: 4, kind: input, shape index: {}]
  %s5 = inlined_call_operand.hbm [shape: f32[2,4,16,128], index: 5, kind: output, shape index: {}]
  %s6 = sld [smem:[#allocation0]]
  $region73: #{tpu_custom_call.1} parent=0
    _
  %s8 = ssub.s32 1, %s6
  %s9 = scalar_select 0, %s8, %s6
  $region1: #{tpu_custom_call.1} parent=0
    #allocation2 [shape = 'u8[65536]{0}', space=vmem, size = 0x10000, scoped, tag = 'input window, operand 0']
    #allocation3 [shape = 's32[2]{0}', space=sflag, size = 0x8, scoped, tag = 'scoped memory for tpu_custom_call.1']
    #allocation4 [shape = 's32[2]{0}', space=sflag, size = 0x8, scoped, tag = 'scoped memory for tpu_custom_call.1']
    #allocation5 [shape = 's32[2]{0}', space=sflag, size = 0x8, scoped, tag = 'scoped memory for tpu_custom_call.1']
    #allocation6 [shape = 's32[2]{0}', space=sflag, size = 0x8, scoped, tag = 'scoped memory for tpu_custom_call.1']
    #allocation7 [shape = 'u8[512]{0}', space=smem, size = 0x200, scoped, tag = 'input window, operand 1, single buffered']
    #allocation8 [shape = 'u8[512]{0}', space=smem, size = 0x200, scoped, tag = 'input window, operand 2, single buffered']
    #allocation9 [shape = 'u8[512]{0}', space=smem, size = 0x200, scoped, tag = 'input window, operand 3, single buffered']
    #allocation10 [shape = 's32[1]{0}', space=sflag, size = 0x4, scoped, tag = 'scoped memory for tpu_custom_call.1']
    #allocation11 [shape = 'u8[512]{0}', space=smem, size = 0x200, scoped, tag = 'input window, operand 4, single buffered']
    #allocation12 [shape = 'u8[65536]{0}', space=vmem, size = 0x10000, scoped, tag = 'output window, operand 0']
    %10 = vsyncpa [#allocation3], 0
    %s11 = scalar_lea.sflag [#allocation3], 1
    %12 = vsyncpa %s11, 0
    %13 = vsyncpa [#allocation5], 0
    %14 = vsyncpa [#allocation6], 0
    %15 = vsyncpa [#allocation10], 0
    %16 = vsyncpa [#allocation4], 0
    %s17 = scalar_lea.sflag [#allocation4], 1
    %18 = vsyncpa %s17, 0
    loop: start=0, step=1, limit=4
    $region2: #{tpu_custom_call.1} parent=1 // loop_pre_header
      _
    $region3: #{tpu_custom_call.1} parent=1 // loop_header
      %s20 = sphi 0, %s24
      %p21 = scmp.ge.s32.totalorder %s20, 4
      %s27 = sphi 0, %s39
      %s28 = sphi 0, %s35
      %s29 = sphi 0, %s27
      %s30 = sphi 0, %s28
      %s31 = sphi 0, %s29
      %s32 = sphi 0, %s30
      %s44 = sphi 0, %s46
      %s47 = sphi 0, %s44
      %s48 = sphi 0, %s47
      %s64 = sphi 0, %s48
      %s68 = sphi 0, %s68
      %s70 = sphi 0, %s68
      %s71 = sphi 0, %s70
      %s85 = sphi 0, %s71
      %s89 = sphi 0, %s89
      %s91 = sphi 0, %s89
      %s92 = sphi 0, %s91
      %s106 = sphi 0, %s92
      %s110 = sphi 0, %s110
      %s112 = sphi 0, %s110
      %s113 = sphi 0, %s112
      %s127 = sphi 0, %s113
      %s131 = sphi 0, %s131
      %s133 = sphi 0, %s131
      %s134 = sphi 0, %s133
      %s148 = sphi 0, %s134
      %s156 = sphi 0, %s158
      %s159 = sphi 0, %s156
      %s160 = sphi 0, %s159
      %s176 = sphi 0, %s160
    $region4: #{tpu_custom_call.1} parent=1 // loop_header_branch
      %23 = sbr.rel (%p21) target = $region8
    $region5: #{tpu_custom_call.1} parent=1 // loop_body
      %s25 = ssub.s32 %s20, 1
      %s26 = ssub.s32 %s20, 2
      %s33 = sadd.s32 1, %s28
      %p34 = scmp.ge.s32.totalorder %s33, 1
      %s35 = scalar_select %p34, 0, %s33
      %s36 = sadd.s32 1, %s27
      %s37 = scalar_select %p34, %s36, %s27
      %p38 = scmp.ge.s32.totalorder %s37, 2
      %s39 = scalar_select %p38, 0, %s37
      %s40 = ssub.s32 %s27, %s39
      %s41 = ssub.s32 %s28, %s35
      %s42 = sor.u32 %s40, %s41
      %p43 = scmp.eq.s32.totalorder %s42, 0
      %s45 = sadd.s32 %s44, 1
      %s46 = scalar_select %p43, %s44, %s45
      %p49 = pneg %p43
      %p50 = scmp.eq.s32.totalorder %s20, 1
      %p51 = por %p49, %p50
      %p52 = scmp.ne.s32.totalorder %s44, %s47
      %p53 = scmp.eq.s32.totalorder %s20, 0
      %p54 = por %p52, %p53
      %p55 = scmp.ne.s32.totalorder %s44, %s47
      %p56 = scmp.eq.s32.totalorder %s25, 1
      %p57 = por %p55, %p56
      %p58 = scmp.ne.s32.totalorder %s47, %s48
      %p59 = scmp.eq.s32.totalorder %s25, 0
      %p60 = por %p58, %p59
      %p61 = scmp.ne.s32.totalorder %s47, %s48
      %p62 = scmp.eq.s32.totalorder %s26, 1
      %p63 = por %p61, %p62
      %p65 = scmp.ne.s32.totalorder %s48, %s64
      %p66 = scmp.eq.s32.totalorder %s26, 0
      %p67 = por %p65, %p66
      %s69 = sadd.s32 %s68, 1
      %p72 = scmp.eq.s32.totalorder %s20, 1
      %p73 = scmp.ne.s32.totalorder %s68, %s70
      %p74 = scmp.eq.s32.totalorder %s20, 0
      %p75 = por %p73, %p74
      %p76 = scmp.ne.s32.totalorder %s68, %s70
      %p77 = scmp.eq.s32.totalorder %s25, 1
      %p78 = por %p76, %p77
      %p79 = scmp.ne.s32.totalorder %s70, %s71
      %p80 = scmp.eq.s32.totalorder %s25, 0
      %p81 = por %p79, %p80
      %p82 = scmp.ne.s32.totalorder %s70, %s71
      %p83 = scmp.eq.s32.totalorder %s26, 1
      %p84 = por %p82, %p83
      %p86 = scmp.ne.s32.totalorder %s71, %s85
      %p87 = scmp.eq.s32.totalorder %s26, 0
      %p88 = por %p86, %p87
      %s90 = sadd.s32 %s89, 1
      %p93 = scmp.eq.s32.totalorder %s20, 1
      %p94 = scmp.ne.s32.totalorder %s89, %s91
      %p95 = scmp.eq.s32.totalorder %s20, 0
      %p96 = por %p94, %p95
      %p97 = scmp.ne.s32.totalorder %s89, %s91
      %p98 = scmp.eq.s32.totalorder %s25, 1
      %p99 = por %p97, %p98
      %p100 = scmp.ne.s32.totalorder %s91, %s92
      %p101 = scmp.eq.s32.totalorder %s25, 0
      %p102 = por %p100, %p101
      %p103 = scmp.ne.s32.totalorder %s91, %s92
      %p104 = scmp.eq.s32.totalorder %s26, 1
      %p105 = por %p103, %p104
      %p107 = scmp.ne.s32.totalorder %s92, %s106
      %p108 = scmp.eq.s32.totalorder %s26, 0
      %p109 = por %p107, %p108
      %s111 = sadd.s32 %s110, 1
      %p114 = scmp.eq.s32.totalorder %s20, 1
      %p115 = scmp.ne.s32.totalorder %s110, %s112
      %p116 = scmp.eq.s32.totalorder %s20, 0
      %p117 = por %p115, %p116
      %p118 = scmp.ne.s32.totalorder %s110, %s112
      %p119 = scmp.eq.s32.totalorder %s25, 1
      %p120 = por %p118, %p119
      %p121 = scmp.ne.s32.totalorder %s112, %s113
      %p122 = scmp.eq.s32.totalorder %s25, 0
      %p123 = por %p121, %p122
      %p124 = scmp.ne.s32.totalorder %s112, %s113
      %p125 = scmp.eq.s32.totalorder %s26, 1
      %p126 = por %p124, %p125
      %p128 = scmp.ne.s32.totalorder %s113, %s127
      %p129 = scmp.eq.s32.totalorder %s26, 0
      %p130 = por %p128, %p129
      %s132 = sadd.s32 %s131, 1
      %p135 = scmp.eq.s32.totalorder %s20, 1
      %p136 = scmp.ne.s32.totalorder %s131, %s133
      %p137 = scmp.eq.s32.totalorder %s20, 0
      %p138 = por %p136, %p137
      %p139 = scmp.ne.s32.totalorder %s131, %s133
      %p140 = scmp.eq.s32.totalorder %s25, 1
      %p141 = por %p139, %p140
      %p142 = scmp.ne.s32.totalorder %s133, %s134
      %p143 = scmp.eq.s32.totalorder %s25, 0
      %p144 = por %p142, %p143
      %p145 = scmp.ne.s32.totalorder %s133, %s134
      %p146 = scmp.eq.s32.totalorder %s26, 1
      %p147 = por %p145, %p146
      %p149 = scmp.ne.s32.totalorder %s134, %s148
      %p150 = scmp.eq.s32.totalorder %s26, 0
      %p151 = por %p149, %p150
      %s152 = ssub.s32 %s27, %s39
      %s153 = ssub.s32 %s28, %s35
      %s154 = sor.u32 %s152, %s153
      %p155 = scmp.eq.s32.totalorder %s154, 0
      %s157 = sadd.s32 %s156, 1
      %s158 = scalar_select %p155, %s156, %s157
      %p161 = pneg %p155
      %p162 = scmp.eq.s32.totalorder %s20, 1
      %p163 = por %p161, %p162
      %p164 = scmp.ne.s32.totalorder %s156, %s159
      %p165 = scmp.eq.s32.totalorder %s20, 0
      %p166 = por %p164, %p165
      %p167 = scmp.ne.s32.totalorder %s156, %s159
      %p168 = scmp.eq.s32.totalorder %s25, 1
      %p169 = por %p167, %p168
      %p170 = scmp.ne.s32.totalorder %s159, %s160
      %p171 = scmp.eq.s32.totalorder %s25, 0
      %p172 = por %p170, %p171
      %p173 = scmp.ne.s32.totalorder %s159, %s160
      %p174 = scmp.eq.s32.totalorder %s26, 1
      %p175 = por %p173, %p174
      %p177 = scmp.ne.s32.totalorder %s160, %s176
      %p178 = scmp.eq.s32.totalorder %s26, 0
      %p179 = por %p177, %p178
      %p180 = scmp.le.s32.totalorder 1, %s20
      %p181 = scmp.lt.s32.totalorder %s20, 3
      %p182 = pnand %p180, %p181
      %p183 = pneg %p182
      // Predicated region
      $region9: #{tpu_custom_call.1} parent=5 // pred_check
        _
      $region10: #{tpu_custom_call.1} parent=5 // pred_check_branch
        %185 = sbr.rel (%p182) target = $region12
      $region11: #{tpu_custom_call.1} parent=5 // pred_region
        %s186 = ssub.s32 %s20, 1
        // Predicated region
        $region13: #{tpu_custom_call.1} parent=11 // pred_check
          %p187 = pneg %p81
        $region14: #{tpu_custom_call.1} parent=11 // pred_check_branch
          %189 = sbr.rel (%p187) target = $region16
        $region15: #{tpu_custom_call.1} parent=11 // pred_region
          %191 = vsyncadd [#allocation5], 0
          %s193 = sshll.u32 %s1, 4
          %s194 = int_to_ptr.hbm [resolvable:$true] %s193
          %196 = dma.hbm_to_smem %s194, 16, [#allocation7], [#allocation5]
        $region16: #{tpu_custom_call.1} parent=11 // pred_fallthru
          _
        // Predicated region
        $region17: #{tpu_custom_call.1} parent=11 // pred_check
          %p197 = pneg %p102
        $region18: #{tpu_custom_call.1} parent=11 // pred_check_branch
          %199 = sbr.rel (%p197) target = $region20
        $region19: #{tpu_custom_call.1} parent=11 // pred_region
          %201 = vsyncadd [#allocation6], 0
          %s203 = sshll.u32 %s2, 4
          %s204 = int_to_ptr.vmem [resolvable:$true] %s203
          %206 = dma.vmem_to_smem %s204, 16, [#allocation8], [#allocation6]
        $region20: #{tpu_custom_call.1} parent=11 // pred_fallthru
          _
        // Predicated region
        $region21: #{tpu_custom_call.1} parent=11 // pred_check
          %p207 = pneg %p123
        $region22: #{tpu_custom_call.1} parent=11 // pred_check_branch
          %209 = sbr.rel (%p207) target = $region24
        $region23: #{tpu_custom_call.1} parent=11 // pred_region
          %211 = vsyncadd [#allocation10], 0
          %s213 = sshll.u32 %s3, 4
          %s214 = int_to_ptr.vmem [resolvable:$true] %s213
          %216 = dma.vmem_to_smem %s214, 16, [#allocation9], [#allocation10]
        $region24: #{tpu_custom_call.1} parent=11 // pred_fallthru
          _
        // Predicated region
        $region25: #{tpu_custom_call.1} parent=11 // pred_check
          %p217 = pneg %p144
        $region26: #{tpu_custom_call.1} parent=11 // pred_check_branch
          %219 = sbr.rel (%p217) target = $region28
        $region27: #{tpu_custom_call.1} parent=11 // pred_region
          %221 = vsyncadd [#allocation10], 0
          %s223 = sshll.u32 %s4, 4
          %s224 = int_to_ptr.vmem [resolvable:$true] %s223
          %226 = dma.vmem_to_smem %s224, 16, [#allocation11], [#allocation10]
        $region28: #{tpu_custom_call.1} parent=11 // pred_fallthru
          _
      $region12: #{tpu_custom_call.1} parent=5 // pred_fallthru
        _
      %p227 = scmp.lt.s32.totalorder %s20, 2
      // Predicated region
      $region29: #{tpu_custom_call.1} parent=5 // pred_check
        %p228 = pneg %p227
      $region30: #{tpu_custom_call.1} parent=5 // pred_check_branch
        %230 = sbr.rel (%p228) target = $region32
      $region31: #{tpu_custom_call.1} parent=5 // pred_region
        // Predicated region
        $region33: #{tpu_custom_call.1} parent=31 // pred_check
          %p231 = pneg %p54
        $region34: #{tpu_custom_call.1} parent=31 // pred_check_branch
          %233 = sbr.rel (%p231) target = $region36
        $region35: #{tpu_custom_call.1} parent=31 // pred_region
          #allocation14 [shape = 'u32[6]{0}', space=smem, size = 0x18, scoped, tag = 'DMA stride descriptor']
          %s234 = sand.u32 %s44, 1
          %s235 = scalar_lea.sflag [#allocation3], %s234
          %s236 = sand.u32 %s44, 1
          %s237 = smul.addr %s236, 64
          %s238 = scalar_lea.vmem [#allocation2], %s237
          %s239 = smul.u32 2, %s28
          %241 = vsyncadd %s235, 0
          %s242 = smul.addr %s27, 4
          %s243 = sadd.s32 %s239, %s242
          %s244 = smul.addr %s243, 8
          %s245 = scalar_lea.hbm %s0, %s244
          %s247 = sshll.u32 1, 14
          %s248 = sxor.u32 4294967295, %s247
          %s250 = sld [smem:[#allocation0]]
          %s251 = sadd.s32 2, %s250
          %s253 = sshll.u32 7, 26
          %s254 = sxor.u32 4294967295, %s253
          %s255 = sand.u32 0, %s254
          %s256 = sshll.u32 %s251, 26
          %s257 = sor.u32 %s255, %s256
          %s258 = sshll.u32 %s245, 4
          %s259 = int_to_ptr.hbm [resolvable:$true] %s258
          %s260 = sshll.u32 %s238, 4
          %s261 = int_to_ptr.vmem [resolvable:$true] %s260
          %267 = sst [smem:[#allocation14]] 1024
          %s268 = scalar_lea.smem [#allocation14], 1
          %269 = sst [smem:[%s268]] 512
          %s270 = scalar_lea.smem [#allocation14], 2
          %271 = sst [smem:[%s270]] 4
          %s272 = scalar_lea.smem [#allocation14], 3
          %273 = sst [smem:[%s272]] 128
          %s274 = scalar_lea.smem [#allocation14], 4
          %275 = sst [smem:[%s274]] 128
          %s276 = scalar_lea.smem [#allocation14], 5
          %277 = sst [smem:[%s276]] 8
          %279 = dma.general %s259, 1024, %s261, %s235, [#allocation13], [#allocation14], %s257, 0
        $region36: #{tpu_custom_call.1} parent=31 // pred_fallthru
          _
      $region32: #{tpu_custom_call.1} parent=5 // pred_fallthru
        _
      %p280 = scmp.le.s32.totalorder 1, %s20
      %p281 = scmp.lt.s32.totalorder %s20, 3
      %p282 = pnand %p280, %p281
      %p283 = pneg %p282
      // Predicated region
      $region37: #{tpu_custom_call.1} parent=5 // pred_check
        _
      $region38: #{tpu_custom_call.1} parent=5 // pred_check_branch
        %285 = sbr.rel (%p282) target = $region40
      $region39: #{tpu_custom_call.1} parent=5 // pred_region
        %s286 = ssub.s32 %s20, 1
        %s287 = sand.u32 %s47, 1
        %s288 = scalar_lea.sflag [#allocation3], %s287
        %s289 = sand.u32 %s47, 1
        %s290 = smul.addr %s289, 64
        %s291 = scalar_lea.vmem [#allocation2], %s290
        // Predicated region
        $region41: #{tpu_custom_call.1} parent=39 // pred_check
          %p292 = pneg %p60
        $region42: #{tpu_custom_call.1} parent=39 // pred_check_branch
          %294 = sbr.rel (%p292) target = $region44
        $region43: #{tpu_custom_call.1} parent=39 // pred_region
          %296 = dma.done %s288, 1024
        $region44: #{tpu_custom_call.1} parent=39 // pred_fallthru
          _
        // Predicated region
        $region45: #{tpu_custom_call.1} parent=39 // pred_check
          %p297 = pneg %p81
        $region46: #{tpu_custom_call.1} parent=39 // pred_check_branch
          %299 = sbr.rel (%p297) target = $region48
        $region47: #{tpu_custom_call.1} parent=39 // pred_region
          %301 = dma.done [#allocation5], 16
        $region48: #{tpu_custom_call.1} parent=39 // pred_fallthru
          _
        // Predicated region
        $region49: #{tpu_custom_call.1} parent=39 // pred_check
          %p302 = pneg %p102
        $region50: #{tpu_custom_call.1} parent=39 // pred_check_branch
          %304 = sbr.rel (%p302) target = $region52
        $region51: #{tpu_custom_call.1} parent=39 // pred_region
          %306 = dma.done [#allocation6], 16
        $region52: #{tpu_custom_call.1} parent=39 // pred_fallthru
          _
        // Predicated region
        $region53: #{tpu_custom_call.1} parent=39 // pred_check
          %p307 = pneg %p123
        $region54: #{tpu_custom_call.1} parent=39 // pred_check_branch
          %309 = sbr.rel (%p307) target = $region56
        $region55: #{tpu_custom_call.1} parent=39 // pred_region
          %311 = dma.done [#allocation10], 16
        $region56: #{tpu_custom_call.1} parent=39 // pred_fallthru
          _
        // Predicated region
        $region57: #{tpu_custom_call.1} parent=39 // pred_check
          %p312 = pneg %p144
        $region58: #{tpu_custom_call.1} parent=39 // pred_check_branch
          %314 = sbr.rel (%p312) target = $region60
        $region59: #{tpu_custom_call.1} parent=39 // pred_region
          %316 = dma.done [#allocation10], 16
        $region60: #{tpu_custom_call.1} parent=39 // pred_fallthru
          _
        %317 = sfence
        %s318 = sand.u32 %s47, 1
        %s319 = scalar_lea.sflag [#allocation3], %s318
        %s320 = sand.u32 %s47, 1
        %s321 = smul.addr %s320, 64
        %s322 = scalar_lea.vmem [#allocation2], %s321
        %p323 = pneg %p60
        %p324 = pneg %p57
        %p325 = pneg %p81
        %p326 = pneg %p78
        %p327 = pneg %p102
        %p328 = pneg %p99
        %p329 = pneg %p123
        %p330 = pneg %p120
        %p331 = pneg %p144
        %p332 = pneg %p141
        %p333 = pneg %p172
        %p334 = pneg %p169
        %s335 = sand.u32 %s159, 1
        %s336 = scalar_lea.sflag [#allocation4], %s335
        %s337 = sand.u32 %s159, 1
        %s338 = smul.addr %s337, 64
        %s339 = scalar_lea.vmem [#allocation12], %s338
        %s340 = smul.u32 2, %s30
        %s341 = smul.u32 2, %s30
        %v342 = vlaneseq
        %v343 = vand.u32 %v342, 127
        %vm344 = vcmp.ge.s32.totalorder %v343, 1
        %vm345 = vcmp.ge.s32.totalorder %v343, 2
        %v346 = vld [vmem:[%s291] sm:$0xff]
        %v347 = vld [vmem:[%s291 + $0x8] sm:$0xff]
        %s348 = scalar_lea.vmem %s291, 16 [#allocation2]
        %v349 = vld [vmem:[%s348] sm:$0xff]
        %v350 = vld [vmem:[%s348 + $0x8] sm:$0xff]
        %351 = vrot.lane.b32.xlu0 %v346, 2
        %v352 = vpop.permute.xlu0 %351
        %353 = vrot.lane.b32.xlu0 %v347, 2
        %v354 = vpop.permute.xlu0 %353
        %v355 = vsel %vm345, %v352, 0.0
        %v356 = vsel %vm345, %v354, 0.0
        %357 = vrot.lane.b32.xlu0 %v349, 2
        %v358 = vpop.permute.xlu0 %357
        %359 = vrot.lane.b32.xlu0 %v350, 2
        %v360 = vpop.permute.xlu0 %359
        %v361 = vsel %vm345, %v358, 0.0
        %v362 = vsel %vm345, %v360, 0.0
        %363 = vrot.lane.b32.xlu0 %v346, 1
        %v364 = vpop.permute.xlu0 %363
        %365 = vrot.lane.b32.xlu0 %v347, 1
        %v366 = vpop.permute.xlu0 %365
        %v367 = vsel %vm344, %v364, 0.0
        %v368 = vsel %vm344, %v366, 0.0
        %369 = vrot.lane.b32.xlu0 %v349, 1
        %v370 = vpop.permute.xlu0 %369
        %371 = vrot.lane.b32.xlu0 %v350, 1
        %v372 = vpop.permute.xlu0 %371
        %v373 = vsel %vm344, %v370, 0.0
        %v374 = vsel %vm344, %v372, 0.0
        %s375 = scalar_lea.vmem %s291, 32 [#allocation2]
        %v376 = vld [vmem:[%s375] sm:$0xff]
        %v377 = vld [vmem:[%s375 + $0x8] sm:$0xff]
        %s378 = scalar_lea.vmem %s291, 48 [#allocation2]
        %v379 = vld [vmem:[%s378] sm:$0xff]
        %v380 = vld [vmem:[%s378 + $0x8] sm:$0xff]
        %381 = vrot.lane.b32.xlu0 %v376, 2
        %v382 = vpop.permute.xlu0 %381
        %383 = vrot.lane.b32.xlu0 %v377, 2
        %v384 = vpop.permute.xlu0 %383
        %v385 = vsel %vm345, %v382, 0.0
        %v386 = vsel %vm345, %v384, 0.0
        %387 = vrot.lane.b32.xlu0 %v379, 2
        %v388 = vpop.permute.xlu0 %387
        %389 = vrot.lane.b32.xlu0 %v380, 2
        %v390 = vpop.permute.xlu0 %389
        %v391 = vsel %vm345, %v388, 0.0
        %v392 = vsel %vm345, %v390, 0.0
        %393 = vrot.lane.b32.xlu0 %v376, 1
        %v394 = vpop.permute.xlu0 %393
        %395 = vrot.lane.b32.xlu0 %v377, 1
        %v396 = vpop.permute.xlu0 %395
        %v397 = vsel %vm344, %v394, 0.0
        %v398 = vsel %vm344, %v396, 0.0
        %399 = vrot.lane.b32.xlu0 %v379, 1
        %v400 = vpop.permute.xlu0 %399
        %401 = vrot.lane.b32.xlu0 %v380, 1
        %v402 = vpop.permute.xlu0 %401
        %v403 = vsel %vm344, %v400, 0.0
        %v404 = vsel %vm344, %v402, 0.0
        %s405 = sld [smem:[#allocation7]]
        %s406 = sld [smem:[#allocation8]]
        %v407 = vstv %s405
        %v408 = vmul.f32 %v407, %v355
        %v409 = vmul.f32 %v407, %v356
        %v410 = vstv %s406
        %v411 = vmul.f32 %v410, %v361
        %v412 = vmul.f32 %v410, %v362
        %v413 = vsub.f32 %v408, %v411
        %v414 = vsub.f32 %v409, %v412
        %v415 = vmul.f32 %v410, %v355
        %v416 = vmul.f32 %v410, %v356
        %v417 = vmul.f32 %v407, %v361
        %v418 = vmul.f32 %v407, %v362
        %v419 = vadd.f32 %v415, %v417
        %v420 = vadd.f32 %v416, %v418
        %s421 = sld [smem:[#allocation7 + $0x1]]
        %s422 = sld [smem:[#allocation8 + $0x1]]
        %v423 = vstv %s421
        %v424 = vmul.f32 %v423, %v367
        %v425 = vmul.f32 %v423, %v368
        %v426 = vstv %s422
        %v427 = vmul.f32 %v426, %v373
        %v428 = vmul.f32 %v426, %v374
        %v429 = vsub.f32 %v424, %v427
        %v430 = vsub.f32 %v425, %v428
        %v431 = vmul.f32 %v426, %v367
        %v432 = vmul.f32 %v426, %v368
        %v433 = vmul.f32 %v423, %v373
        %v434 = vmul.f32 %v423, %v374
        %v435 = vadd.f32 %v431, %v433
        %v436 = vadd.f32 %v432, %v434
        %v437 = vadd.f32 %v413, %v429
        %v438 = vadd.f32 %v414, %v430
        %v439 = vadd.f32 %v419, %v435
        %v440 = vadd.f32 %v420, %v436
        %s441 = sld [smem:[#allocation7 + $0x2]]
        %s442 = sld [smem:[#allocation8 + $0x2]]
        %v443 = vstv %s441
        %v444 = vmul.f32 %v443, %v346
        %v445 = vmul.f32 %v443, %v347
        %v446 = vstv %s442
        %v447 = vmul.f32 %v446, %v349
        %v448 = vmul.f32 %v446, %v350
        %v449 = vsub.f32 %v444, %v447
        %v450 = vsub.f32 %v445, %v448
        %v451 = vmul.f32 %v446, %v346
        %v452 = vmul.f32 %v446, %v347
        %v453 = vmul.f32 %v443, %v349
        %v454 = vmul.f32 %v443, %v350
        %v455 = vadd.f32 %v451, %v453
        %v456 = vadd.f32 %v452, %v454
        %v457 = vadd.f32 %v437, %v449
        %v458 = vadd.f32 %v438, %v450
        %v459 = vadd.f32 %v439, %v455
        %v460 = vadd.f32 %v440, %v456
        %s461 = sld [smem:[#allocation7 + $0x3]]
        %s462 = sld [smem:[#allocation8 + $0x3]]
        %v463 = vstv %s461
        %v464 = vmul.f32 %v463, %v385
        %v465 = vmul.f32 %v463, %v386
        %v466 = vstv %s462
        %v467 = vmul.f32 %v466, %v391
        %v468 = vmul.f32 %v466, %v392
        %v469 = vsub.f32 %v464, %v467
        %v470 = vsub.f32 %v465, %v468
        %v471 = vmul.f32 %v466, %v385
        %v472 = vmul.f32 %v466, %v386
        %v473 = vmul.f32 %v463, %v391
        %v474 = vmul.f32 %v463, %v392
        %v475 = vadd.f32 %v471, %v473
        %v476 = vadd.f32 %v472, %v474
        %v477 = vadd.f32 %v457, %v469
        %v478 = vadd.f32 %v458, %v470
        %v479 = vadd.f32 %v459, %v475
        %v480 = vadd.f32 %v460, %v476
        %s481 = sld [smem:[#allocation7 + $0x4]]
        %s482 = sld [smem:[#allocation8 + $0x4]]
        %v483 = vstv %s481
        %v484 = vmul.f32 %v483, %v397
        %v485 = vmul.f32 %v483, %v398
        %v486 = vstv %s482
        %v487 = vmul.f32 %v486, %v403
        %v488 = vmul.f32 %v486, %v404
        %v489 = vsub.f32 %v484, %v487
        %v490 = vsub.f32 %v485, %v488
        %v491 = vmul.f32 %v486, %v397
        %v492 = vmul.f32 %v486, %v398
        %v493 = vmul.f32 %v483, %v403
        %v494 = vmul.f32 %v483, %v404
        %v495 = vadd.f32 %v491, %v493
        %v496 = vadd.f32 %v492, %v494
        %v497 = vadd.f32 %v477, %v489
        %v498 = vadd.f32 %v478, %v490
        %v499 = vadd.f32 %v479, %v495
        %v500 = vadd.f32 %v480, %v496
        %s501 = sld [smem:[#allocation7 + $0x5]]
        %s502 = sld [smem:[#allocation8 + $0x5]]
        %v503 = vstv %s501
        %v504 = vmul.f32 %v503, %v376
        %v505 = vmul.f32 %v503, %v377
        %v506 = vstv %s502
        %v507 = vmul.f32 %v506, %v379
        %v508 = vmul.f32 %v506, %v380
        %v509 = vsub.f32 %v504, %v507
        %v510 = vsub.f32 %v505, %v508
        %v511 = vmul.f32 %v506, %v376
        %v512 = vmul.f32 %v506, %v377
        %v513 = vmul.f32 %v503, %v379
        %v514 = vmul.f32 %v503, %v380
        %v515 = vadd.f32 %v511, %v513
        %v516 = vadd.f32 %v512, %v514
        %v517 = vadd.f32 %v497, %v509
        %v518 = vadd.f32 %v498, %v510
        %v519 = vadd.f32 %v499, %v515
        %v520 = vadd.f32 %v500, %v516
        %s521 = sld [smem:[#allocation9]]
        %v522 = vstv %s521
        %v523 = vadd.f32 %v517, %v522
        %v524 = vadd.f32 %v518, %v522
        %s525 = sld [smem:[#allocation11]]
        %v526 = vstv %s525
        %v527 = vadd.f32 %v519, %v526
        %v528 = vadd.f32 %v520, %v526
        %v529 = vmul.f32 %v523, %v523
        %v530 = vmul.f32 %v524, %v524
        %v531 = vmul.f32 %v527, %v527
        %v532 = vmul.f32 %v528, %v528
        %v533 = vadd.f32 %v529, %v531
        %v534 = vadd.f32 %v530, %v532
        %v535 = vadd.f32 %v533, 1e-08
        %v536 = vadd.f32 %v534, 1e-08
        %v537 = vrsqrt.pop %v535
        %v538 = vmul.f32 %v537, %v535
        %v539 = vmul.f32 %v538, %v537
        %v540 = vmul.f32 0.5, %v539
        %v541 = vsub.f32 1.5, %v540
        %v542 = vmul.f32 %v537, %v541
        %v543 = vmul.f32 %v535, %v542
        %vm544 = vcmp.eq.f32.partialorder %v535, inf
        %v545 = vsel %vm544, %v535, %v543
        %vm546 = vcmp.eq.f32.partialorder %v535, 0.0
        %v547 = vand.u32 %v535, 2147483648
        %v548 = vsel %vm546, %v547, %v545
        %v549 = vrsqrt.pop %v536
        %v550 = vmul.f32 %v549, %v536
        %v551 = vmul.f32 %v550, %v549
        %v552 = vmul.f32 0.5, %v551
        %v553 = vsub.f32 1.5, %v552
        %v554 = vmul.f32 %v549, %v553
        %v555 = vmul.f32 %v536, %v554
        %vm556 = vcmp.eq.f32.partialorder %v536, inf
        %v557 = vsel %vm556, %v536, %v555
        %vm558 = vcmp.eq.f32.partialorder %v536, 0.0
        %v559 = vand.u32 %v536, 2147483648
        %v560 = vsel %vm558, %v559, %v557
        %v561 = vrsqrt.pop %v548
        %v562 = vmul.f32 %v561, %v548
        %v563 = vmul.f32 %v562, %v561
        %v564 = vmul.f32 0.5, %v563
        %v565 = vsub.f32 1.5, %v564
        %v566 = vmul.f32 %v561, %v565
        %v567 = vmul.f32 %v548, %v566
        %vm568 = vcmp.eq.f32.partialorder %v548, inf
        %v569 = vsel %vm568, %v548, %v567
        %vm570 = vcmp.eq.f32.partialorder %v548, 0.0
        %v571 = vand.u32 %v548, 2147483648
        %v572 = vsel %vm570, %v571, %v569
        %v573 = vrsqrt.pop %v560
        %v574 = vmul.f32 %v573, %v560
        %v575 = vmul.f32 %v574, %v573
        %v576 = vmul.f32 0.5, %v575
        %v577 = vsub.f32 1.5, %v576
        %v578 = vmul.f32 %v573, %v577
        %v579 = vmul.f32 %v560, %v578
        %vm580 = vcmp.eq.f32.partialorder %v560, inf
        %v581 = vsel %vm580, %v560, %v579
        %vm582 = vcmp.eq.f32.partialorder %v560, 0.0
        %v583 = vand.u32 %v560, 2147483648
        %v584 = vsel %vm582, %v583, %v581
        %585 = vst [vmem:[%s339] sm:$0xff] %v572
        %586 = vst [vmem:[%s339 + $0x8] sm:$0xff] %v584
        %s587 = sld [smem:[#allocation7 + $0x6]]
        %s588 = sld [smem:[#allocation8 + $0x6]]
        %v589 = vstv %s587
        %v590 = vmul.f32 %v589, %v355
        %v591 = vmul.f32 %v589, %v356
        %v592 = vstv %s588
        %v593 = vmul.f32 %v592, %v361
        %v594 = vmul.f32 %v592, %v362
        %v595 = vsub.f32 %v590, %v593
        %v596 = vsub.f32 %v591, %v594
        %v597 = vmul.f32 %v592, %v355
        %v598 = vmul.f32 %v592, %v356
        %v599 = vmul.f32 %v589, %v361
        %v600 = vmul.f32 %v589, %v362
        %v601 = vadd.f32 %v597, %v599
        %v602 = vadd.f32 %v598, %v600
        %s603 = sld [smem:[#allocation7 + $0x7]]
        %s604 = sld [smem:[#allocation8 + $0x7]]
        %v605 = vstv %s603
        %v606 = vmul.f32 %v605, %v367
        %v607 = vmul.f32 %v605, %v368
        %v608 = vstv %s604
        %v609 = vmul.f32 %v608, %v373
        %v610 = vmul.f32 %v608, %v374
        %v611 = vsub.f32 %v606, %v609
        %v612 = vsub.f32 %v607, %v610
        %v613 = vmul.f32 %v608, %v367
        %v614 = vmul.f32 %v608, %v368
        %v615 = vmul.f32 %v605, %v373
        %v616 = vmul.f32 %v605, %v374
        %v617 = vadd.f32 %v613, %v615
        %v618 = vadd.f32 %v614, %v616
        %v619 = vadd.f32 %v595, %v611
        %v620 = vadd.f32 %v596, %v612
        %v621 = vadd.f32 %v601, %v617
        %v622 = vadd.f32 %v602, %v618
        %s623 = sld [smem:[#allocation7 + $0x8]]
        %s624 = sld [smem:[#allocation8 + $0x8]]
        %v625 = vstv %s623
        %v626 = vmul.f32 %v625, %v346
        %v627 = vmul.f32 %v625, %v347
        %v628 = vstv %s624
        %v629 = vmul.f32 %v628, %v349
        %v630 = vmul.f32 %v628, %v350
        %v631 = vsub.f32 %v626, %v629
        %v632 = vsub.f32 %v627, %v630
        %v633 = vmul.f32 %v628, %v346
        %v634 = vmul.f32 %v628, %v347
        %v635 = vmul.f32 %v625, %v349
        %v636 = vmul.f32 %v625, %v350
        %v637 = vadd.f32 %v633, %v635
        %v638 = vadd.f32 %v634, %v636
        %v639 = vadd.f32 %v619, %v631
        %v640 = vadd.f32 %v620, %v632
        %v641 = vadd.f32 %v621, %v637
        %v642 = vadd.f32 %v622, %v638
        %s643 = sld [smem:[#allocation7 + $0x9]]
        %s644 = sld [smem:[#allocation8 + $0x9]]
        %v645 = vstv %s643
        %v646 = vmul.f32 %v645, %v385
        %v647 = vmul.f32 %v645, %v386
        %v648 = vstv %s644
        %v649 = vmul.f32 %v648, %v391
        %v650 = vmul.f32 %v648, %v392
        %v651 = vsub.f32 %v646, %v649
        %v652 = vsub.f32 %v647, %v650
        %v653 = vmul.f32 %v648, %v385
        %v654 = vmul.f32 %v648, %v386
        %v655 = vmul.f32 %v645, %v391
        %v656 = vmul.f32 %v645, %v392
        %v657 = vadd.f32 %v653, %v655
        %v658 = vadd.f32 %v654, %v656
        %v659 = vadd.f32 %v639, %v651
        %v660 = vadd.f32 %v640, %v652
        %v661 = vadd.f32 %v641, %v657
        %v662 = vadd.f32 %v642, %v658
        %s663 = sld [smem:[#allocation7 + $0xa]]
        %s664 = sld [smem:[#allocation8 + $0xa]]
        %v665 = vstv %s663
        %v666 = vmul.f32 %v665, %v397
        %v667 = vmul.f32 %v665, %v398
        %v668 = vstv %s664
        %v669 = vmul.f32 %v668, %v403
        %v670 = vmul.f32 %v668, %v404
        %v671 = vsub.f32 %v666, %v669
        %v672 = vsub.f32 %v667, %v670
        %v673 = vmul.f32 %v668, %v397
        %v674 = vmul.f32 %v668, %v398
        %v675 = vmul.f32 %v665, %v403
        %v676 = vmul.f32 %v665, %v404
        %v677 = vadd.f32 %v673, %v675
        %v678 = vadd.f32 %v674, %v676
        %v679 = vadd.f32 %v659, %v671
        %v680 = vadd.f32 %v660, %v672
        %v681 = vadd.f32 %v661, %v677
        %v682 = vadd.f32 %v662, %v678
        %s683 = sld [smem:[#allocation7 + $0xb]]
        %s684 = sld [smem:[#allocation8 + $0xb]]
        %v685 = vstv %s683
        %v686 = vmul.f32 %v685, %v376
        %v687 = vmul.f32 %v685, %v377
        %v688 = vstv %s684
        %v689 = vmul.f32 %v688, %v379
        %v690 = vmul.f32 %v688, %v380
        %v691 = vsub.f32 %v686, %v689
        %v692 = vsub.f32 %v687, %v690
        %v693 = vmul.f32 %v688, %v376
        %v694 = vmul.f32 %v688, %v377
        %v695 = vmul.f32 %v685, %v379
        %v696 = vmul.f32 %v685, %v380
        %v697 = vadd.f32 %v693, %v695
        %v698 = vadd.f32 %v694, %v696
        %v699 = vadd.f32 %v679, %v691
        %v700 = vadd.f32 %v680, %v692
        %v701 = vadd.f32 %v681, %v697
        %v702 = vadd.f32 %v682, %v698
        %s703 = sld [smem:[#allocation9 + $0x1]]
        %v704 = vstv %s703
        %v705 = vadd.f32 %v699, %v704
        %v706 = vadd.f32 %v700, %v704
        %s707 = sld [smem:[#allocation11 + $0x1]]
        %v708 = vstv %s707
        %v709 = vadd.f32 %v701, %v708
        %v710 = vadd.f32 %v702, %v708
        %v711 = vmul.f32 %v705, %v705
        %v712 = vmul.f32 %v706, %v706
        %v713 = vmul.f32 %v709, %v709
        %v714 = vmul.f32 %v710, %v710
        %v715 = vadd.f32 %v711, %v713
        %v716 = vadd.f32 %v712, %v714
        %v717 = vadd.f32 %v715, 1e-08
        %v718 = vadd.f32 %v716, 1e-08
        %v719 = vrsqrt.pop %v717
        %v720 = vmul.f32 %v719, %v717
        %v721 = vmul.f32 %v720, %v719
        %v722 = vmul.f32 0.5, %v721
        %v723 = vsub.f32 1.5, %v722
        %v724 = vmul.f32 %v719, %v723
        %v725 = vmul.f32 %v717, %v724
        %vm726 = vcmp.eq.f32.partialorder %v717, inf
        %v727 = vsel %vm726, %v717, %v725
        %vm728 = vcmp.eq.f32.partialorder %v717, 0.0
        %v729 = vand.u32 %v717, 2147483648
        %v730 = vsel %vm728, %v729, %v727
        %v731 = vrsqrt.pop %v718
        %v732 = vmul.f32 %v731, %v718
        %v733 = vmul.f32 %v732, %v731
        %v734 = vmul.f32 0.5, %v733
        %v735 = vsub.f32 1.5, %v734
        %v736 = vmul.f32 %v731, %v735
        %v737 = vmul.f32 %v718, %v736
        %vm738 = vcmp.eq.f32.partialorder %v718, inf
        %v739 = vsel %vm738, %v718, %v737
        %vm740 = vcmp.eq.f32.partialorder %v718, 0.0
        %v741 = vand.u32 %v718, 2147483648
        %v742 = vsel %vm740, %v741, %v739
        %v743 = vrsqrt.pop %v730
        %v744 = vmul.f32 %v743, %v730
        %v745 = vmul.f32 %v744, %v743
        %v746 = vmul.f32 0.5, %v745
        %v747 = vsub.f32 1.5, %v746
        %v748 = vmul.f32 %v743, %v747
        %v749 = vmul.f32 %v730, %v748
        %vm750 = vcmp.eq.f32.partialorder %v730, inf
        %v751 = vsel %vm750, %v730, %v749
        %vm752 = vcmp.eq.f32.partialorder %v730, 0.0
        %v753 = vand.u32 %v730, 2147483648
        %v754 = vsel %vm752, %v753, %v751
        %v755 = vrsqrt.pop %v742
        %v756 = vmul.f32 %v755, %v742
        %v757 = vmul.f32 %v756, %v755
        %v758 = vmul.f32 0.5, %v757
        %v759 = vsub.f32 1.5, %v758
        %v760 = vmul.f32 %v755, %v759
        %v761 = vmul.f32 %v742, %v760
        %vm762 = vcmp.eq.f32.partialorder %v742, inf
        %v763 = vsel %vm762, %v742, %v761
        %vm764 = vcmp.eq.f32.partialorder %v742, 0.0
        %v765 = vand.u32 %v742, 2147483648
        %v766 = vsel %vm764, %v765, %v763
        %s767 = scalar_lea.vmem %s339, 16 [#allocation12]
        %768 = vst [vmem:[%s767] sm:$0xff] %v754
        %769 = vst [vmem:[%s767 + $0x8] sm:$0xff] %v766
        %s770 = sld [smem:[#allocation7 + $0xc]]
        %s771 = sld [smem:[#allocation8 + $0xc]]
        %v772 = vstv %s770
        %v773 = vmul.f32 %v772, %v355
        %v774 = vmul.f32 %v772, %v356
        %v775 = vstv %s771
        %v776 = vmul.f32 %v775, %v361
        %v777 = vmul.f32 %v775, %v362
        %v778 = vsub.f32 %v773, %v776
        %v779 = vsub.f32 %v774, %v777
        %v780 = vmul.f32 %v775, %v355
        %v781 = vmul.f32 %v775, %v356
        %v782 = vmul.f32 %v772, %v361
        %v783 = vmul.f32 %v772, %v362
        %v784 = vadd.f32 %v780, %v782
        %v785 = vadd.f32 %v781, %v783
        %s786 = sld [smem:[#allocation7 + $0xd]]
        %s787 = sld [smem:[#allocation8 + $0xd]]
        %v788 = vstv %s786
        %v789 = vmul.f32 %v788, %v367
        %v790 = vmul.f32 %v788, %v368
        %v791 = vstv %s787
        %v792 = vmul.f32 %v791, %v373
        %v793 = vmul.f32 %v791, %v374
        %v794 = vsub.f32 %v789, %v792
        %v795 = vsub.f32 %v790, %v793
        %v796 = vmul.f32 %v791, %v367
        %v797 = vmul.f32 %v791, %v368
        %v798 = vmul.f32 %v788, %v373
        %v799 = vmul.f32 %v788, %v374
        %v800 = vadd.f32 %v796, %v798
        %v801 = vadd.f32 %v797, %v799
        %v802 = vadd.f32 %v778, %v794
        %v803 = vadd.f32 %v779, %v795
        %v804 = vadd.f32 %v784, %v800
        %v805 = vadd.f32 %v785, %v801
        %s806 = sld [smem:[#allocation7 + $0xe]]
        %s807 = sld [smem:[#allocation8 + $0xe]]
        %v808 = vstv %s806
        %v809 = vmul.f32 %v808, %v346
        %v810 = vmul.f32 %v808, %v347
        %v811 = vstv %s807
        %v812 = vmul.f32 %v811, %v349
        %v813 = vmul.f32 %v811, %v350
        %v814 = vsub.f32 %v809, %v812
        %v815 = vsub.f32 %v810, %v813
        %v816 = vmul.f32 %v811, %v346
        %v817 = vmul.f32 %v811, %v347
        %v818 = vmul.f32 %v808, %v349
        %v819 = vmul.f32 %v808, %v350
        %v820 = vadd.f32 %v816, %v818
        %v821 = vadd.f32 %v817, %v819
        %v822 = vadd.f32 %v802, %v814
        %v823 = vadd.f32 %v803, %v815
        %v824 = vadd.f32 %v804, %v820
        %v825 = vadd.f32 %v805, %v821
        %s826 = sld [smem:[#allocation7 + $0xf]]
        %s827 = sld [smem:[#allocation8 + $0xf]]
        %v828 = vstv %s826
        %v829 = vmul.f32 %v828, %v385
        %v830 = vmul.f32 %v828, %v386
        %v831 = vstv %s827
        %v832 = vmul.f32 %v831, %v391
        %v833 = vmul.f32 %v831, %v392
        %v834 = vsub.f32 %v829, %v832
        %v835 = vsub.f32 %v830, %v833
        %v836 = vmul.f32 %v831, %v385
        %v837 = vmul.f32 %v831, %v386
        %v838 = vmul.f32 %v828, %v391
        %v839 = vmul.f32 %v828, %v392
        %v840 = vadd.f32 %v836, %v838
        %v841 = vadd.f32 %v837, %v839
        %v842 = vadd.f32 %v822, %v834
        %v843 = vadd.f32 %v823, %v835
        %v844 = vadd.f32 %v824, %v840
        %v845 = vadd.f32 %v825, %v841
        %s846 = sld [smem:[#allocation7 + $0x10]]
        %s847 = sld [smem:[#allocation8 + $0x10]]
        %v848 = vstv %s846
        %v849 = vmul.f32 %v848, %v397
        %v850 = vmul.f32 %v848, %v398
        %v851 = vstv %s847
        %v852 = vmul.f32 %v851, %v403
        %v853 = vmul.f32 %v851, %v404
        %v854 = vsub.f32 %v849, %v852
        %v855 = vsub.f32 %v850, %v853
        %v856 = vmul.f32 %v851, %v397
        %v857 = vmul.f32 %v851, %v398
        %v858 = vmul.f32 %v848, %v403
        %v859 = vmul.f32 %v848, %v404
        %v860 = vadd.f32 %v856, %v858
        %v861 = vadd.f32 %v857, %v859
        %v862 = vadd.f32 %v842, %v854
        %v863 = vadd.f32 %v843, %v855
        %v864 = vadd.f32 %v844, %v860
        %v865 = vadd.f32 %v845, %v861
        %s866 = sld [smem:[#allocation7 + $0x11]]
        %s867 = sld [smem:[#allocation8 + $0x11]]
        %v868 = vstv %s866
        %v869 = vmul.f32 %v868, %v376
        %v870 = vmul.f32 %v868, %v377
        %v871 = vstv %s867
        %v872 = vmul.f32 %v871, %v379
        %v873 = vmul.f32 %v871, %v380
        %v874 = vsub.f32 %v869, %v872
        %v875 = vsub.f32 %v870, %v873
        %v876 = vmul.f32 %v871, %v376
        %v877 = vmul.f32 %v871, %v377
        %v878 = vmul.f32 %v868, %v379
        %v879 = vmul.f32 %v868, %v380
        %v880 = vadd.f32 %v876, %v878
        %v881 = vadd.f32 %v877, %v879
        %v882 = vadd.f32 %v862, %v874
        %v883 = vadd.f32 %v863, %v875
        %v884 = vadd.f32 %v864, %v880
        %v885 = vadd.f32 %v865, %v881
        %s886 = sld [smem:[#allocation9 + $0x2]]
        %v887 = vstv %s886
        %v888 = vadd.f32 %v882, %v887
        %v889 = vadd.f32 %v883, %v887
        %s890 = sld [smem:[#allocation11 + $0x2]]
        %v891 = vstv %s890
        %v892 = vadd.f32 %v884, %v891
        %v893 = vadd.f32 %v885, %v891
        %v894 = vmul.f32 %v888, %v888
        %v895 = vmul.f32 %v889, %v889
        %v896 = vmul.f32 %v892, %v892
        %v897 = vmul.f32 %v893, %v893
        %v898 = vadd.f32 %v894, %v896
        %v899 = vadd.f32 %v895, %v897
        %v900 = vadd.f32 %v898, 1e-08
        %v901 = vadd.f32 %v899, 1e-08
        %v902 = vrsqrt.pop %v900
        %v903 = vmul.f32 %v902, %v900
        %v904 = vmul.f32 %v903, %v902
        %v905 = vmul.f32 0.5, %v904
        %v906 = vsub.f32 1.5, %v905
        %v907 = vmul.f32 %v902, %v906
        %v908 = vmul.f32 %v900, %v907
        %vm909 = vcmp.eq.f32.partialorder %v900, inf
        %v910 = vsel %vm909, %v900, %v908
        %vm911 = vcmp.eq.f32.partialorder %v900, 0.0
        %v912 = vand.u32 %v900, 2147483648
        %v913 = vsel %vm911, %v912, %v910
        %v914 = vrsqrt.pop %v901
        %v915 = vmul.f32 %v914, %v901
        %v916 = vmul.f32 %v915, %v914
        %v917 = vmul.f32 0.5, %v916
        %v918 = vsub.f32 1.5, %v917
        %v919 = vmul.f32 %v914, %v918
        %v920 = vmul.f32 %v901, %v919
        %vm921 = vcmp.eq.f32.partialorder %v901, inf
        %v922 = vsel %vm921, %v901, %v920
        %vm923 = vcmp.eq.f32.partialorder %v901, 0.0
        %v924 = vand.u32 %v901, 2147483648
        %v925 = vsel %vm923, %v924, %v922
        %v926 = vrsqrt.pop %v913
        %v927 = vmul.f32 %v926, %v913
        %v928 = vmul.f32 %v927, %v926
        %v929 = vmul.f32 0.5, %v928
        %v930 = vsub.f32 1.5, %v929
        %v931 = vmul.f32 %v926, %v930
        %v932 = vmul.f32 %v913, %v931
        %vm933 = vcmp.eq.f32.partialorder %v913, inf
        %v934 = vsel %vm933, %v913, %v932
        %vm935 = vcmp.eq.f32.partialorder %v913, 0.0
        %v936 = vand.u32 %v913, 2147483648
        %v937 = vsel %vm935, %v936, %v934
        %v938 = vrsqrt.pop %v925
        %v939 = vmul.f32 %v938, %v925
        %v940 = vmul.f32 %v939, %v938
        %v941 = vmul.f32 0.5, %v940
        %v942 = vsub.f32 1.5, %v941
        %v943 = vmul.f32 %v938, %v942
        %v944 = vmul.f32 %v925, %v943
        %vm945 = vcmp.eq.f32.partialorder %v925, inf
        %v946 = vsel %vm945, %v925, %v944
        %vm947 = vcmp.eq.f32.partialorder %v925, 0.0
        %v948 = vand.u32 %v925, 2147483648
        %v949 = vsel %vm947, %v948, %v946
        %s950 = scalar_lea.vmem %s339, 32 [#allocation12]
        %951 = vst [vmem:[%s950] sm:$0xff] %v937
        %952 = vst [vmem:[%s950 + $0x8] sm:$0xff] %v949
        %s953 = sld [smem:[#allocation7 + $0x12]]
        %s954 = sld [smem:[#allocation8 + $0x12]]
        %v955 = vstv %s953
        %v956 = vmul.f32 %v955, %v355
        %v957 = vmul.f32 %v955, %v356
        %v958 = vstv %s954
        %v959 = vmul.f32 %v958, %v361
        %v960 = vmul.f32 %v958, %v362
        %v961 = vsub.f32 %v956, %v959
        %v962 = vsub.f32 %v957, %v960
        %v963 = vmul.f32 %v958, %v355
        %v964 = vmul.f32 %v958, %v356
        %v965 = vmul.f32 %v955, %v361
        %v966 = vmul.f32 %v955, %v362
        %v967 = vadd.f32 %v963, %v965
        %v968 = vadd.f32 %v964, %v966
        %s969 = sld [smem:[#allocation7 + $0x13]]
        %s970 = sld [smem:[#allocation8 + $0x13]]
        %v971 = vstv %s969
        %v972 = vmul.f32 %v971, %v367
        %v973 = vmul.f32 %v971, %v368
        %v974 = vstv %s970
        %v975 = vmul.f32 %v974, %v373
        %v976 = vmul.f32 %v974, %v374
        %v977 = vsub.f32 %v972, %v975
        %v978 = vsub.f32 %v973, %v976
        %v979 = vmul.f32 %v974, %v367
        %v980 = vmul.f32 %v974, %v368
        %v981 = vmul.f32 %v971, %v373
        %v982 = vmul.f32 %v971, %v374
        %v983 = vadd.f32 %v979, %v981
        %v984 = vadd.f32 %v980, %v982
        %v985 = vadd.f32 %v961, %v977
        %v986 = vadd.f32 %v962, %v978
        %v987 = vadd.f32 %v967, %v983
        %v988 = vadd.f32 %v968, %v984
        %s989 = sld [smem:[#allocation7 + $0x14]]
        %s990 = sld [smem:[#allocation8 + $0x14]]
        %v991 = vstv %s989
        %v992 = vmul.f32 %v991, %v346
        %v993 = vmul.f32 %v991, %v347
        %v994 = vstv %s990
        %v995 = vmul.f32 %v994, %v349
        %v996 = vmul.f32 %v994, %v350
        %v997 = vsub.f32 %v992, %v995
        %v998 = vsub.f32 %v993, %v996
        %v999 = vmul.f32 %v994, %v346
        %v1000 = vmul.f32 %v994, %v347
        %v1001 = vmul.f32 %v991, %v349
        %v1002 = vmul.f32 %v991, %v350
        %v1003 = vadd.f32 %v999, %v1001
        %v1004 = vadd.f32 %v1000, %v1002
        %v1005 = vadd.f32 %v985, %v997
        %v1006 = vadd.f32 %v986, %v998
        %v1007 = vadd.f32 %v987, %v1003
        %v1008 = vadd.f32 %v988, %v1004
        %s1009 = sld [smem:[#allocation7 + $0x15]]
        %s1010 = sld [smem:[#allocation8 + $0x15]]
        %v1011 = vstv %s1009
        %v1012 = vmul.f32 %v1011, %v385
        %v1013 = vmul.f32 %v1011, %v386
        %v1014 = vstv %s1010
        %v1015 = vmul.f32 %v1014, %v391
        %v1016 = vmul.f32 %v1014, %v392
        %v1017 = vsub.f32 %v1012, %v1015
        %v1018 = vsub.f32 %v1013, %v1016
        %v1019 = vmul.f32 %v1014, %v385
        %v1020 = vmul.f32 %v1014, %v386
        %v1021 = vmul.f32 %v1011, %v391
        %v1022 = vmul.f32 %v1011, %v392
        %v1023 = vadd.f32 %v1019, %v1021
        %v1024 = vadd.f32 %v1020, %v1022
        %v1025 = vadd.f32 %v1005, %v1017
        %v1026 = vadd.f32 %v1006, %v1018
        %v1027 = vadd.f32 %v1007, %v1023
        %v1028 = vadd.f32 %v1008, %v1024
        %s1029 = sld [smem:[#allocation7 + $0x16]]
        %s1030 = sld [smem:[#allocation8 + $0x16]]
        %v1031 = vstv %s1029
        %v1032 = vmul.f32 %v1031, %v397
        %v1033 = vmul.f32 %v1031, %v398
        %v1034 = vstv %s1030
        %v1035 = vmul.f32 %v1034, %v403
        %v1036 = vmul.f32 %v1034, %v404
        %v1037 = vsub.f32 %v1032, %v1035
        %v1038 = vsub.f32 %v1033, %v1036
        %v1039 = vmul.f32 %v1034, %v397
        %v1040 = vmul.f32 %v1034, %v398
        %v1041 = vmul.f32 %v1031, %v403
        %v1042 = vmul.f32 %v1031, %v404
        %v1043 = vadd.f32 %v1039, %v1041
        %v1044 = vadd.f32 %v1040, %v1042
        %v1045 = vadd.f32 %v1025, %v1037
        %v1046 = vadd.f32 %v1026, %v1038
        %v1047 = vadd.f32 %v1027, %v1043
        %v1048 = vadd.f32 %v1028, %v1044
        %s1049 = sld [smem:[#allocation7 + $0x17]]
        %s1050 = sld [smem:[#allocation8 + $0x17]]
        %v1051 = vstv %s1049
        %v1052 = vmul.f32 %v1051, %v376
        %v1053 = vmul.f32 %v1051, %v377
        %v1054 = vstv %s1050
        %v1055 = vmul.f32 %v1054, %v379
        %v1056 = vmul.f32 %v1054, %v380
        %v1057 = vsub.f32 %v1052, %v1055
        %v1058 = vsub.f32 %v1053, %v1056
        %v1059 = vmul.f32 %v1054, %v376
        %v1060 = vmul.f32 %v1054, %v377
        %v1061 = vmul.f32 %v1051, %v379
        %v1062 = vmul.f32 %v1051, %v380
        %v1063 = vadd.f32 %v1059, %v1061
        %v1064 = vadd.f32 %v1060, %v1062
        %v1065 = vadd.f32 %v1045, %v1057
        %v1066 = vadd.f32 %v1046, %v1058
        %v1067 = vadd.f32 %v1047, %v1063
        %v1068 = vadd.f32 %v1048, %v1064
        %s1069 = sld [smem:[#allocation9 + $0x3]]
        %v1070 = vstv %s1069
        %v1071 = vadd.f32 %v1065, %v1070
        %v1072 = vadd.f32 %v1066, %v1070
        %s1073 = sld [smem:[#allocation11 + $0x3]]
        %v1074 = vstv %s1073
        %v1075 = vadd.f32 %v1067, %v1074
        %v1076 = vadd.f32 %v1068, %v1074
        %v1077 = vmul.f32 %v1071, %v1071
        %v1078 = vmul.f32 %v1072, %v1072
        %v1079 = vmul.f32 %v1075, %v1075
        %v1080 = vmul.f32 %v1076, %v1076
        %v1081 = vadd.f32 %v1077, %v1079
        %v1082 = vadd.f32 %v1078, %v1080
        %v1083 = vadd.f32 %v1081, 1e-08
        %v1084 = vadd.f32 %v1082, 1e-08
        %v1085 = vrsqrt.pop %v1083
        %v1086 = vmul.f32 %v1085, %v1083
        %v1087 = vmul.f32 %v1086, %v1085
        %v1088 = vmul.f32 0.5, %v1087
        %v1089 = vsub.f32 1.5, %v1088
        %v1090 = vmul.f32 %v1085, %v1089
        %v1091 = vmul.f32 %v1083, %v1090
        %vm1092 = vcmp.eq.f32.partialorder %v1083, inf
        %v1093 = vsel %vm1092, %v1083, %v1091
        %vm1094 = vcmp.eq.f32.partialorder %v1083, 0.0
        %v1095 = vand.u32 %v1083, 2147483648
        %v1096 = vsel %vm1094, %v1095, %v1093
        %v1097 = vrsqrt.pop %v1084
        %v1098 = vmul.f32 %v1097, %v1084
        %v1099 = vmul.f32 %v1098, %v1097
        %v1100 = vmul.f32 0.5, %v1099
        %v1101 = vsub.f32 1.5, %v1100
        %v1102 = vmul.f32 %v1097, %v1101
        %v1103 = vmul.f32 %v1084, %v1102
        %vm1104 = vcmp.eq.f32.partialorder %v1084, inf
        %v1105 = vsel %vm1104, %v1084, %v1103
        %vm1106 = vcmp.eq.f32.partialorder %v1084, 0.0
        %v1107 = vand.u32 %v1084, 2147483648
        %v1108 = vsel %vm1106, %v1107, %v1105
        %v1109 = vrsqrt.pop %v1096
        %v1110 = vmul.f32 %v1109, %v1096
        %v1111 = vmul.f32 %v1110, %v1109
        %v1112 = vmul.f32 0.5, %v1111
        %v1113 = vsub.f32 1.5, %v1112
        %v1114 = vmul.f32 %v1109, %v1113
        %v1115 = vmul.f32 %v1096, %v1114
        %vm1116 = vcmp.eq.f32.partialorder %v1096, inf
        %v1117 = vsel %vm1116, %v1096, %v1115
        %vm1118 = vcmp.eq.f32.partialorder %v1096, 0.0
        %v1119 = vand.u32 %v1096, 2147483648
        %v1120 = vsel %vm1118, %v1119, %v1117
        %v1121 = vrsqrt.pop %v1108
        %v1122 = vmul.f32 %v1121, %v1108
        %v1123 = vmul.f32 %v1122, %v1121
        %v1124 = vmul.f32 0.5, %v1123
        %v1125 = vsub.f32 1.5, %v1124
        %v1126 = vmul.f32 %v1121, %v1125
        %v1127 = vmul.f32 %v1108, %v1126
        %vm1128 = vcmp.eq.f32.partialorder %v1108, inf
        %v1129 = vsel %vm1128, %v1108, %v1127
        %vm1130 = vcmp.eq.f32.partialorder %v1108, 0.0
        %v1131 = vand.u32 %v1108, 2147483648
        %v1132 = vsel %vm1130, %v1131, %v1129
        %s1133 = scalar_lea.vmem %s339, 48 [#allocation12]
        %1134 = vst [vmem:[%s1133] sm:$0xff] %v1120
        %1135 = vst [vmem:[%s1133 + $0x8] sm:$0xff] %v1132
        %s1136 = sand.u32 %s159, 1
        %s1137 = scalar_lea.sflag [#allocation4], %s1136
        %s1138 = sand.u32 %s159, 1
        %s1139 = smul.addr %s1138, 64
        %s1140 = scalar_lea.vmem [#allocation12], %s1139
        // Predicated region
        $region61: #{tpu_custom_call.1} parent=39 // pred_check
          %p1141 = pneg %p169
        $region62: #{tpu_custom_call.1} parent=39 // pred_check_branch
          %1143 = sbr.rel (%p1141) target = $region64
        $region63: #{tpu_custom_call.1} parent=39 // pred_region
          %s1144 = smul.u32 2, %s30
          %1146 = vsyncadd %s1137, 0
          %s1147 = smul.addr %s29, 8
          %s1148 = sadd.s32 %s1144, %s1147
          %s1149 = smul.addr %s1148, 8
          %s1150 = scalar_lea.hbm %s5, %s1149
          %s1151 = sshll.u32 %s1140, 4
          %s1152 = int_to_ptr.vmem [resolvable:$true] %s1151
          %s1153 = sshll.u32 %s1150, 4
          %s1154 = int_to_ptr.hbm [resolvable:$true] %s1153
          %1159 = dma.vmem_to_hbm [thread:$0]  %s1152, 1024, %s1154, %s1137, 128, 128, 8
        $region64: #{tpu_custom_call.1} parent=39 // pred_fallthru
          _
      $region40: #{tpu_custom_call.1} parent=5 // pred_fallthru
        _
      %p1160 = scmp.le.s32.totalorder 2, %s20
      // Predicated region
      $region65: #{tpu_custom_call.1} parent=5 // pred_check
        %p1161 = pneg %p1160
      $region66: #{tpu_custom_call.1} parent=5 // pred_check_branch
        %1163 = sbr.rel (%p1161) target = $region68
      $region67: #{tpu_custom_call.1} parent=5 // pred_region
        %s1164 = ssub.s32 %s20, 2
        // Predicated region
        $region69: #{tpu_custom_call.1} parent=67 // pred_check
          %p1165 = pneg %p175
        $region70: #{tpu_custom_call.1} parent=67 // pred_check_branch
          %1167 = sbr.rel (%p1165) target = $region72
        $region71: #{tpu_custom_call.1} parent=67 // pred_region
          %s1168 = sand.u32 %s160, 1
          %s1169 = scalar_lea.sflag [#allocation4], %s1168
          %s1170 = sand.u32 %s160, 1
          %s1171 = smul.addr %s1170, 64
          %s1172 = scalar_lea.vmem [#allocation12], %s1171
          %1174 = dma.done %s1169, 1024
        $region72: #{tpu_custom_call.1} parent=67 // pred_fallthru
          _
      $region68: #{tpu_custom_call.1} parent=5 // pred_fallthru
        _
    $region6: #{tpu_custom_call.1} parent=1 // loop_footer
      %s24 = sadd.s32 1, %s20
    $region7: #{tpu_custom_call.1} parent=1 // loop_footer_branch
      %19 = sbr.rel target = $region3
    $region8: #{tpu_custom_call.1} parent=1 // loop_exit
      _
    %1175 = vsyncpa [#allocation3], 1
    %s1176 = scalar_lea.sflag [#allocation3], 1
    %1177 = vsyncpa %s1176, 1
    %1178 = vsyncpa [#allocation4], 1
    %s1179 = scalar_lea.sflag [#allocation4], 1
    %1180 = vsyncpa %s1179, 1
    %1181 = vsyncpa [#allocation5], 1
    %s1182 = scalar_lea.sflag [#allocation5], 1
    %1183 = vsyncpa %s1182, 1
    %1184 = vsyncpa [#allocation6], 1
    %s1185 = scalar_lea.sflag [#allocation6], 1
    %1186 = vsyncpa %s1185, 1
    %1187 = vsyncpa [#allocation10], 1

</llo_original>
